<compile_context>
chip_gen: v6e
topology: v6e:2x2x1
jax: 0.10.0
libtpu: 0.0.40
codegen_flags: <defaults>
</compile_context>

<pallas_src>
import math

import jax
import jax.numpy as jnp
from jax.experimental import pallas as pl
from jax.experimental.pallas import tpu as pltpu


# ---------------- config (consistent with XLMRobertaConfig fields) ----------
HIDDEN = 32          # config.hidden_size
NUM_HEADS = 4        # config.num_attention_heads
HEAD_DIM = HIDDEN // NUM_HEADS
INTERMEDIATE = 64    # config.intermediate_size
LN_EPS = 1e-5        # config.layer_norm_eps
SEQ = 8
BATCH = 2
SCALING = HEAD_DIM ** -0.5

COMPUTE_DTYPE = jnp.bfloat16   # MXU operand dtype (accumulation stays f32)


def _layernorm(x, gamma, beta, eps):
    mean = jnp.mean(x, axis=-1, keepdims=True)
    xc = x - mean
    var = jnp.mean(xc * xc, axis=-1, keepdims=True)
    inv = jax.lax.rsqrt(var + eps)
    return xc * inv * gamma + beta


def _gelu_exact(x):
    # torch get_act_fn("gelu") -> exact erf-based GELU
    return 0.5 * x * (1.0 + jax.lax.erf(x / math.sqrt(2.0)))


def xlm_roberta_layer_kernel(
    x_ref,       # [1, S, H]  one sequence per grid step (f32)
    w_qkv_ref,   # [H, 3H]    bf16, lane-dense; softmax scaling folded into Q cols
    w_ao_ref,    # [H, H]     bf16
    w_i_ref,     # [H, I]     bf16
    w_o_ref,     # [I, H]     bf16
    rows_ref,    # [8, max(3H, I)] f32: b_qkv|b_ao|g1|bt1|b_o|g2|bt2|b_i (one/sublane)
    out_ref,     # [1, S, H]
):
    _, S, H = x_ref.shape
    I = w_i_ref.shape[1]
    nh, hd = NUM_HEADS, HEAD_DIM
    cd = COMPUTE_DTYPE

    # -- unpack packed row-vector params: sublane index + lane slice starting at 0 --
    rows = rows_ref[...]
    b_qkv = rows[0:1, :3 * H]
    b_ao = rows[1:2, :H]
    g1 = rows[2:3, :H]
    bt1 = rows[3:4, :H]
    b_o = rows[4:5, :H]
    g2 = rows[5:6, :H]
    bt2 = rows[6:7, :H]
    b_i = rows[7:8, :I]

    xs = x_ref[0]                                                  # [S, H] f32

    # ---- QKV projection: one lane-dense GEMM, f32 accumulation ----
    qkv = jnp.dot(xs.astype(cd), w_qkv_ref[...],
                  preferred_element_type=jnp.float32) + b_qkv      # [S, 3H] f32
    qkv = qkv.astype(cd)

    # head split: head_dim stays lane-minor, so these are cheap relayouts
    q = qkv[:, 0 * H:1 * H].reshape(S, nh, hd)
    k = qkv[:, 1 * H:2 * H].reshape(S, nh, hd)
    v = qkv[:, 2 * H:3 * H].reshape(S, nh, hd)

    # ---- bidirectional self-attention, heads batched in one einsum pair ----
    # (1/sqrt(head_dim) scaling was folded into w_q / b_q at pack time)
    scores = jnp.einsum("qnd,knd->nqk", q, k,
                        preferred_element_type=jnp.float32)        # [nh, S, S]
    scores = scores - jnp.max(scores, axis=-1, keepdims=True)
    p = jnp.exp(scores)
    p = p * pl.reciprocal(jnp.sum(p, axis=-1, keepdims=True), approx=True)

    ctx = jnp.einsum("nqk,knd->qnd", p.astype(cd), v,
                     preferred_element_type=jnp.float32)           # [S, nh, hd]
    ctx = ctx.reshape(S, H)                                        # head merge == lane concat

    # ---- attention output dense: one [H, H] GEMM ----
    self_out = jnp.dot(ctx.astype(cd), w_ao_ref[...],
                       preferred_element_type=jnp.float32) + b_ao  # [S, H]

    # ---- residual + LayerNorm (f32) ----
    attn_out = _layernorm(self_out + xs, g1, bt1, LN_EPS)

    # ---- FFN ----
    inter = jnp.dot(attn_out.astype(cd), w_i_ref[...],
                    preferred_element_type=jnp.float32) + b_i      # [S, I]
    inter = _gelu_exact(inter)
    ffn = jnp.dot(inter.astype(cd), w_o_ref[...],
                  preferred_element_type=jnp.float32) + b_o        # [S, H]
    layer_out = _layernorm(ffn + attn_out, g2, bt2, LN_EPS)

    # TODO(synk): for H not a multiple of 128 this store is lane-masked; real
    #             XLM-R (H=768) is already lane-dense.
    out_ref[0] = layer_out.astype(out_ref.dtype)


def pack_params(p):
    """Re-layout torch-style params into the kernel layout (one-off, load time)."""
    H = p["w_qkv"].shape[0]
    I = p["w_i"].shape[1]

    # fold the softmax 1/sqrt(head_dim) scaling into the Q projection
    w_qkv = p["w_qkv"].at[:, :H].multiply(SCALING)
    b_qkv = p["b_qkv"].at[:, :H].multiply(SCALING)

    W = max(3 * H, I)

    def pad(r):  # [1, n] -> [1, W]
        return jnp.pad(r, ((0, 0), (0, W - r.shape[1])))

    rows = jnp.concatenate(
        [pad(b_qkv), pad(p["b_ao"]), pad(p["g1"]), pad(p["bt1"]),
         pad(p["b_o"]), pad(p["g2"]), pad(p["bt2"]), pad(p["b_i"])],
        axis=0).astype(jnp.float32)                                # [8, W]

    cd = COMPUTE_DTYPE
    return dict(w_qkv=w_qkv.astype(cd), w_ao=p["w_ao"].astype(cd),
                w_i=p["w_i"].astype(cd), w_o=p["w_o"].astype(cd), rows=rows)


@jax.jit
def xlm_roberta_layer(x, kp):
    B, S, H = x.shape
    params = [kp["w_qkv"], kp["w_ao"], kp["w_i"], kp["w_o"], kp["rows"]]

    def invariant(arr):
        nd = arr.ndim
        return pl.BlockSpec(arr.shape, lambda b, _nd=nd: (0,) * _nd)

    return pl.pallas_call(
        xlm_roberta_layer_kernel,
        out_shape=jax.ShapeDtypeStruct((B, S, H), x.dtype),
        grid_spec=pltpu.PrefetchScalarGridSpec(
            num_scalar_prefetch=0,
            grid=(B,),
            in_specs=[pl.BlockSpec((1, S, H), lambda b: (b, 0, 0))]
                     + [invariant(a) for a in params],
            out_specs=pl.BlockSpec((1, S, H), lambda b: (b, 0, 0)),
        ),
        compiler_params=pltpu.CompilerParams(
            dimension_semantics=("parallel",),
            vmem_limit_bytes=48 * 1024 * 1024),
    )(x, *params)


def make_params(key):
    ks = jax.random.split(key, 8)
    scale = 0.02
    return {
        "w_qkv": jax.random.normal(ks[0], (HIDDEN, 3 * HIDDEN), jnp.float32) * scale,
        "b_qkv": jax.random.normal(ks[1], (1, 3 * HIDDEN), jnp.float32) * scale,
        "w_ao":  jax.random.normal(ks[2], (HIDDEN, HIDDEN), jnp.float32) * scale,
        "b_ao":  jax.random.normal(ks[3], (1, HIDDEN), jnp.float32) * scale,
        "g1":    jnp.ones((1, HIDDEN), jnp.float32),
        "bt1":   jnp.zeros((1, HIDDEN), jnp.float32),
        "w_i":   jax.random.normal(ks[4], (HIDDEN, INTERMEDIATE), jnp.float32) * scale,
        "b_i":   jax.random.normal(ks[5], (1, INTERMEDIATE), jnp.float32) * scale,
        "w_o":   jax.random.normal(ks[6], (INTERMEDIATE, HIDDEN), jnp.float32) * scale,
        "b_o":   jax.random.normal(ks[7], (1, HIDDEN), jnp.float32) * scale,
        "g2":    jnp.ones((1, HIDDEN), jnp.float32),
        "bt2":   jnp.zeros((1, HIDDEN), jnp.float32),
    }


def reference_layer(x, p):
    """Pure-JAX f32 reference with torch-equivalent semantics (for verification)."""
    def one(xs):  # xs: [S, H]
        qkv = xs @ p["w_qkv"] + p["b_qkv"][0]
        q, k, v = jnp.split(qkv, 3, axis=-1)
        q = q.reshape(SEQ, NUM_HEADS, HEAD_DIM)
        k = k.reshape(SEQ, NUM_HEADS, HEAD_DIM)
        v = v.reshape(SEQ, NUM_HEADS, HEAD_DIM)
        scores = jnp.einsum("qhd,khd->hqk", q, k) * SCALING
        probs = jax.nn.softmax(scores, axis=-1)
        attn = jnp.einsum("hqk,khd->qhd", probs, v).reshape(SEQ, HIDDEN)
        so = attn @ p["w_ao"] + p["b_ao"][0]
        a_out = _layernorm(so + xs, p["g1"][0], p["bt1"][0], LN_EPS)
        inter = _gelu_exact(a_out @ p["w_i"] + p["b_i"][0])
        ffn = inter @ p["w_o"] + p["b_o"][0]
        return _layernorm(ffn + a_out, p["g2"][0], p["bt2"][0], LN_EPS)
    return jax.vmap(one)(x)


if __name__ == "__main__":
    key = jax.random.PRNGKey(0)
    kx, kp = jax.random.split(key)
    x = jax.random.normal(kx, (BATCH, SEQ, HIDDEN), jnp.float32)
    params = make_params(kp)
    kparams = pack_params(params)

    out = xlm_roberta_layer(x, kparams)
    out = jax.block_until_ready(out)

    ref = reference_layer(x, params)
    assert out.shape == (BATCH, SEQ, HIDDEN)
    # bf16 MXU operands + approx EUP reciprocal in the softmax denom -> ~1e-2 class error
    err = float(jnp.max(jnp.abs(out - ref)))
    assert jnp.allclose(out, ref, atol=2e-2, rtol=2e-2), err

    print("KERNEL_OK")
</pallas_src>

<mosaic_0001>
module attributes {stable_mosaic.version = 11 : i64} {
  func.func @xlm_roberta_layer_kernel(%arg0: i32, %arg1: memref<1x8x32xf32, #tpu.memory_space<vmem>>, %arg2: memref<32x96xbf16, #tpu.memory_space<vmem>>, %arg3: memref<32x32xbf16, #tpu.memory_space<vmem>>, %arg4: memref<32x64xbf16, #tpu.memory_space<vmem>>, %arg5: memref<64x32xbf16, #tpu.memory_space<vmem>>, %arg6: memref<8x96xf32, #tpu.memory_space<vmem>>, %arg7: memref<1x8x32xf32, #tpu.memory_space<vmem>>) attributes {dimension_semantics = [#tpu.dimension_semantics<parallel>], iteration_bounds = array<i64: 2>, scalar_prefetch = 0 : i64, scratch_operands = 0 : i64, tpu.core_type = #tpu.core_type<tc>, window_params = [{transform_indices = @transform_0, window_bounds = array<i64: 1, 8, 32>}, {pipeline_mode = #tpu.pipeline_mode<synchronous>, transform_indices = @transform_1, window_bounds = array<i64: 32, 96>}, {pipeline_mode = #tpu.pipeline_mode<synchronous>, transform_indices = @transform_2, window_bounds = array<i64: 32, 32>}, {pipeline_mode = #tpu.pipeline_mode<synchronous>, transform_indices = @transform_3, window_bounds = array<i64: 32, 64>}, {pipeline_mode = #tpu.pipeline_mode<synchronous>, transform_indices = @transform_4, window_bounds = array<i64: 64, 32>}, {pipeline_mode = #tpu.pipeline_mode<synchronous>, transform_indices = @transform_5, window_bounds = array<i64: 8, 96>}, {transform_indices = @transform_6, window_bounds = array<i64: 1, 8, 32>}]} {
    %c0 = arith.constant 0 : index
    %c0_0 = arith.constant 0 : index
    %0 = vector.load %arg6[%c0, %c0_0] : memref<8x96xf32, #tpu.memory_space<vmem>>, vector<8x96xf32>
    %1 = vector.extract_strided_slice %0 {offsets = [0, 0], sizes = [1, 96], strides = [1, 1]} : vector<8x96xf32> to vector<1x96xf32>
    %2 = vector.extract_strided_slice %0 {offsets = [1, 0], sizes = [1, 32], strides = [1, 1]} : vector<8x96xf32> to vector<1x32xf32>
    %3 = vector.extract_strided_slice %0 {offsets = [2, 0], sizes = [1, 32], strides = [1, 1]} : vector<8x96xf32> to vector<1x32xf32>
    %4 = vector.extract_strided_slice %0 {offsets = [3, 0], sizes = [1, 32], strides = [1, 1]} : vector<8x96xf32> to vector<1x32xf32>
    %5 = vector.extract_strided_slice %0 {offsets = [4, 0], sizes = [1, 32], strides = [1, 1]} : vector<8x96xf32> to vector<1x32xf32>
    %6 = vector.extract_strided_slice %0 {offsets = [5, 0], sizes = [1, 32], strides = [1, 1]} : vector<8x96xf32> to vector<1x32xf32>
    %7 = vector.extract_strided_slice %0 {offsets = [6, 0], sizes = [1, 32], strides = [1, 1]} : vector<8x96xf32> to vector<1x32xf32>
    %8 = vector.extract_strided_slice %0 {offsets = [7, 0], sizes = [1, 64], strides = [1, 1]} : vector<8x96xf32> to vector<1x64xf32>
    %c0_1 = arith.constant 0 : index
    %c0_2 = arith.constant 0 : index
    %c0_3 = arith.constant 0 : index
    %9 = vector.load %arg1[%c0_1, %c0_2, %c0_3] : memref<1x8x32xf32, #tpu.memory_space<vmem>>, vector<1x8x32xf32>
    %10 = vector.shape_cast %9 : vector<1x8x32xf32> to vector<8x32xf32>
    %11 = arith.truncf %10 : vector<8x32xf32> to vector<8x32xbf16>
    %c0_4 = arith.constant 0 : index
    %c0_5 = arith.constant 0 : index
    %12 = vector.load %arg2[%c0_4, %c0_5] : memref<32x96xbf16, #tpu.memory_space<vmem>>, vector<32x96xbf16>
    %cst = arith.constant dense<0.000000e+00> : vector<8x96xf32>
    %13 = tpu.matmul %11, %12, %cst {dimension_numbers = #tpu.dot_dimension_numbers<[1], [0], [0], [1], [0, 0, 1, 1], [], []>} : vector<8x32xbf16>, vector<32x96xbf16>, vector<8x96xf32> -> vector<8x96xf32>
    %14 = vector.broadcast %1 : vector<1x96xf32> to vector<8x96xf32>
    %15 = arith.addf %13, %14 : vector<8x96xf32>
    %16 = arith.truncf %15 : vector<8x96xf32> to vector<8x96xbf16>
    %17 = vector.extract_strided_slice %16 {offsets = [0, 0], sizes = [8, 32], strides = [1, 1]} : vector<8x96xbf16> to vector<8x32xbf16>
    %18 = vector.shape_cast %17 : vector<8x32xbf16> to vector<8x4x8xbf16>
    %19 = vector.extract_strided_slice %16 {offsets = [0, 32], sizes = [8, 32], strides = [1, 1]} : vector<8x96xbf16> to vector<8x32xbf16>
    %20 = vector.shape_cast %19 : vector<8x32xbf16> to vector<8x4x8xbf16>
    %21 = vector.extract_strided_slice %16 {offsets = [0, 64], sizes = [8, 32], strides = [1, 1]} : vector<8x96xbf16> to vector<8x32xbf16>
    %22 = vector.shape_cast %21 : vector<8x32xbf16> to vector<8x4x8xbf16>
    "tpu.trace_start"() <{level = 10 : i32, message = "qnd,knd->nqk"}> : () -> ()
    %cst_6 = arith.constant dense<0.000000e+00> : vector<4x8x8xf32>
    %23 = tpu.matmul %18, %20, %cst_6 {dimension_numbers = #tpu.dot_dimension_numbers<[2], [2], [0], [0], [0, 1, 0, 0, 1, 0], [1], [1]>} : vector<8x4x8xbf16>, vector<8x4x8xbf16>, vector<4x8x8xf32> -> vector<4x8x8xf32>
    "tpu.trace_stop"() : () -> ()
    %cst_7 = arith.constant dense<0xFF800000> : vector<4x8xf32>
    %24 = vector.multi_reduction <maximumf>, %23, %cst_7 [2] : vector<4x8x8xf32> to vector<4x8xf32>
    %25 = vector.shape_cast %24 : vector<4x8xf32> to vector<4x8x1xf32>
    %26 = vector.broadcast %25 : vector<4x8x1xf32> to vector<4x8x8xf32>
    %27 = arith.subf %23, %26 : vector<4x8x8xf32>
    %28 = math.exp %27 : vector<4x8x8xf32>
    %cst_8 = arith.constant dense<0.000000e+00> : vector<4x8xf32>
    %29 = vector.multi_reduction <add>, %28, %cst_8 [2] : vector<4x8x8xf32> to vector<4x8xf32>
    %30 = vector.shape_cast %29 : vector<4x8xf32> to vector<4x8x1xf32>
    %31 = tpu.reciprocal %30 {approx = true} : vector<4x8x1xf32> -> vector<4x8x1xf32>
    %32 = vector.broadcast %31 : vector<4x8x1xf32> to vector<4x8x8xf32>
    %33 = arith.mulf %28, %32 : vector<4x8x8xf32>
    %34 = arith.truncf %33 : vector<4x8x8xf32> to vector<4x8x8xbf16>
    "tpu.trace_start"() <{level = 10 : i32, message = "nqk,knd->qnd"}> : () -> ()
    %cst_9 = arith.constant dense<0.000000e+00> : vector<4x8x8xf32>
    %35 = tpu.matmul %22, %34, %cst_9 {dimension_numbers = #tpu.dot_dimension_numbers<[0], [2], [2], [1], [0, 1, 0, 2, 1, 1], [1], [0]>} : vector<8x4x8xbf16>, vector<4x8x8xbf16>, vector<4x8x8xf32> -> vector<4x8x8xf32>
    %36 = tpu.transpose %35, [2, 0, 1] : vector<4x8x8xf32> -> vector<8x4x8xf32>
    "tpu.trace_stop"() : () -> ()
    %37 = vector.shape_cast %36 : vector<8x4x8xf32> to vector<8x32xf32>
    %38 = arith.truncf %37 : vector<8x32xf32> to vector<8x32xbf16>
    %c0_10 = arith.constant 0 : index
    %c0_11 = arith.constant 0 : index
    %39 = vector.load %arg3[%c0_10, %c0_11] : memref<32x32xbf16, #tpu.memory_space<vmem>>, vector<32x32xbf16>
    %cst_12 = arith.constant dense<0.000000e+00> : vector<8x32xf32>
    %40 = tpu.matmul %38, %39, %cst_12 {dimension_numbers = #tpu.dot_dimension_numbers<[1], [0], [0], [1], [0, 0, 1, 1], [], []>} : vector<8x32xbf16>, vector<32x32xbf16>, vector<8x32xf32> -> vector<8x32xf32>
    %41 = vector.broadcast %2 : vector<1x32xf32> to vector<8x32xf32>
    %42 = arith.addf %40, %41 : vector<8x32xf32>
    %43 = arith.addf %42, %10 : vector<8x32xf32>
    %cst_13 = arith.constant dense<0.000000e+00> : vector<8xf32>
    %44 = vector.multi_reduction <add>, %43, %cst_13 [1] : vector<8x32xf32> to vector<8xf32>
    %45 = vector.shape_cast %44 : vector<8xf32> to vector<8x1xf32>
    %cst_14 = arith.constant 3.200000e+01 : f32
    %46 = vector.broadcast %cst_14 : f32 to vector<8x1xf32>
    %47 = arith.divf %45, %46 : vector<8x1xf32>
    %48 = vector.broadcast %47 : vector<8x1xf32> to vector<8x32xf32>
    %49 = arith.subf %43, %48 : vector<8x32xf32>
    %50 = arith.mulf %49, %49 : vector<8x32xf32>
    %cst_15 = arith.constant dense<0.000000e+00> : vector<8xf32>
    %51 = vector.multi_reduction <add>, %50, %cst_15 [1] : vector<8x32xf32> to vector<8xf32>
    %52 = vector.shape_cast %51 : vector<8xf32> to vector<8x1xf32>
    %cst_16 = arith.constant 3.200000e+01 : f32
    %53 = vector.broadcast %cst_16 : f32 to vector<8x1xf32>
    %54 = arith.divf %52, %53 : vector<8x1xf32>
    %cst_17 = arith.constant 9.99999974E-6 : f32
    %55 = vector.broadcast %cst_17 : f32 to vector<8x1xf32>
    %56 = arith.addf %54, %55 : vector<8x1xf32>
    %57 = math.rsqrt %56 : vector<8x1xf32>
    %58 = vector.broadcast %57 : vector<8x1xf32> to vector<8x32xf32>
    %59 = arith.mulf %49, %58 : vector<8x32xf32>
    %60 = vector.broadcast %3 : vector<1x32xf32> to vector<8x32xf32>
    %61 = arith.mulf %59, %60 : vector<8x32xf32>
    %62 = vector.broadcast %4 : vector<1x32xf32> to vector<8x32xf32>
    %63 = arith.addf %61, %62 : vector<8x32xf32>
    %64 = arith.truncf %63 : vector<8x32xf32> to vector<8x32xbf16>
    %c0_18 = arith.constant 0 : index
    %c0_19 = arith.constant 0 : index
    %65 = vector.load %arg4[%c0_18, %c0_19] : memref<32x64xbf16, #tpu.memory_space<vmem>>, vector<32x64xbf16>
    %cst_20 = arith.constant dense<0.000000e+00> : vector<8x64xf32>
    %66 = tpu.matmul %64, %65, %cst_20 {dimension_numbers = #tpu.dot_dimension_numbers<[1], [0], [0], [1], [0, 0, 1, 1], [], []>} : vector<8x32xbf16>, vector<32x64xbf16>, vector<8x64xf32> -> vector<8x64xf32>
    %67 = vector.broadcast %8 : vector<1x64xf32> to vector<8x64xf32>
    %68 = arith.addf %66, %67 : vector<8x64xf32>
    %cst_21 = arith.constant 5.000000e-01 : f32
    %69 = vector.broadcast %cst_21 : f32 to vector<8x64xf32>
    %70 = arith.mulf %69, %68 : vector<8x64xf32>
    %cst_22 = arith.constant 1.41421354 : f32
    %71 = vector.broadcast %cst_22 : f32 to vector<8x64xf32>
    %72 = arith.divf %68, %71 : vector<8x64xf32>
    %73 = math.erf %72 : vector<8x64xf32>
    %cst_23 = arith.constant 1.000000e+00 : f32
    %74 = vector.broadcast %cst_23 : f32 to vector<8x64xf32>
    %75 = arith.addf %74, %73 : vector<8x64xf32>
    %76 = arith.mulf %70, %75 : vector<8x64xf32>
    %77 = arith.truncf %76 : vector<8x64xf32> to vector<8x64xbf16>
    %c0_24 = arith.constant 0 : index
    %c0_25 = arith.constant 0 : index
    %78 = vector.load %arg5[%c0_24, %c0_25] : memref<64x32xbf16, #tpu.memory_space<vmem>>, vector<64x32xbf16>
    %cst_26 = arith.constant dense<0.000000e+00> : vector<8x32xf32>
    %79 = tpu.matmul %77, %78, %cst_26 {dimension_numbers = #tpu.dot_dimension_numbers<[1], [0], [0], [1], [0, 0, 1, 1], [], []>} : vector<8x64xbf16>, vector<64x32xbf16>, vector<8x32xf32> -> vector<8x32xf32>
    %80 = vector.broadcast %5 : vector<1x32xf32> to vector<8x32xf32>
    %81 = arith.addf %79, %80 : vector<8x32xf32>
    %82 = arith.addf %81, %63 : vector<8x32xf32>
    %cst_27 = arith.constant dense<0.000000e+00> : vector<8xf32>
    %83 = vector.multi_reduction <add>, %82, %cst_27 [1] : vector<8x32xf32> to vector<8xf32>
    %84 = vector.shape_cast %83 : vector<8xf32> to vector<8x1xf32>
    %cst_28 = arith.constant 3.200000e+01 : f32
    %85 = vector.broadcast %cst_28 : f32 to vector<8x1xf32>
    %86 = arith.divf %84, %85 : vector<8x1xf32>
    %87 = vector.broadcast %86 : vector<8x1xf32> to vector<8x32xf32>
    %88 = arith.subf %82, %87 : vector<8x32xf32>
    %89 = arith.mulf %88, %88 : vector<8x32xf32>
    %cst_29 = arith.constant dense<0.000000e+00> : vector<8xf32>
    %90 = vector.multi_reduction <add>, %89, %cst_29 [1] : vector<8x32xf32> to vector<8xf32>
    %91 = vector.shape_cast %90 : vector<8xf32> to vector<8x1xf32>
    %cst_30 = arith.constant 3.200000e+01 : f32
    %92 = vector.broadcast %cst_30 : f32 to vector<8x1xf32>
    %93 = arith.divf %91, %92 : vector<8x1xf32>
    %cst_31 = arith.constant 9.99999974E-6 : f32
    %94 = vector.broadcast %cst_31 : f32 to vector<8x1xf32>
    %95 = arith.addf %93, %94 : vector<8x1xf32>
    %96 = math.rsqrt %95 : vector<8x1xf32>
    %97 = vector.broadcast %96 : vector<8x1xf32> to vector<8x32xf32>
    %98 = arith.mulf %88, %97 : vector<8x32xf32>
    %99 = vector.broadcast %6 : vector<1x32xf32> to vector<8x32xf32>
    %100 = arith.mulf %98, %99 : vector<8x32xf32>
    %101 = vector.broadcast %7 : vector<1x32xf32> to vector<8x32xf32>
    %102 = arith.addf %100, %101 : vector<8x32xf32>
    %c0_32 = arith.constant 0 : index
    %c0_33 = arith.constant 0 : index
    %c0_34 = arith.constant 0 : index
    %103 = vector.load %arg7[%c0_32, %c0_33, %c0_34] : memref<1x8x32xf32, #tpu.memory_space<vmem>>, vector<1x8x32xf32>
    %104 = vector.shape_cast %103 : vector<1x8x32xf32> to vector<8x32xf32>
    %105 = vector.shape_cast %102 : vector<8x32xf32> to vector<1x8x32xf32>
    tpu.vector_store %arg7[%c0_32, %c0_33, %c0_34], %105 {strides = array<i32>} : memref<1x8x32xf32, #tpu.memory_space<vmem>>, vector<1x8x32xf32>,
    return
  }
  func.func @transform_0(%arg0: i32) -> (i32, i32, i32) {
    %c0_i32 = arith.constant 0 : i32
    %c0_i32_0 = arith.constant 0 : i32
    %c0_i32_1 = arith.constant 0 : i32
    return %arg0, %c0_i32, %c0_i32_0 : i32, i32, i32
  }
  func.func @transform_1(%arg0: i32) -> (i32, i32) {
    %c0_i32 = arith.constant 0 : i32
    %c0_i32_0 = arith.constant 0 : i32
    %c0_i32_1 = arith.constant 0 : i32
    return %c0_i32, %c0_i32_0 : i32, i32
  }
  func.func @transform_2(%arg0: i32) -> (i32, i32) {
    %c0_i32 = arith.constant 0 : i32
    %c0_i32_0 = arith.constant 0 : i32
    %c0_i32_1 = arith.constant 0 : i32
    return %c0_i32, %c0_i32_0 : i32, i32
  }
  func.func @transform_3(%arg0: i32) -> (i32, i32) {
    %c0_i32 = arith.constant 0 : i32
    %c0_i32_0 = arith.constant 0 : i32
    %c0_i32_1 = arith.constant 0 : i32
    return %c0_i32, %c0_i32_0 : i32, i32
  }
  func.func @transform_4(%arg0: i32) -> (i32, i32) {
    %c0_i32 = arith.constant 0 : i32
    %c0_i32_0 = arith.constant 0 : i32
    %c0_i32_1 = arith.constant 0 : i32
    return %c0_i32, %c0_i32_0 : i32, i32
  }
  func.func @transform_5(%arg0: i32) -> (i32, i32) {
    %c0_i32 = arith.constant 0 : i32
    %c0_i32_0 = arith.constant 0 : i32
    %c0_i32_1 = arith.constant 0 : i32
    return %c0_i32, %c0_i32_0 : i32, i32
  }
  func.func @transform_6(%arg0: i32) -> (i32, i32, i32) {
    %c0_i32 = arith.constant 0 : i32
    %c0_i32_0 = arith.constant 0 : i32
    %c0_i32_1 = arith.constant 0 : i32
    return %arg0, %c0_i32, %c0_i32_0 : i32, i32, i32
  }
}

</mosaic_0001>

<llo_original>
// kernel: xlm_roberta_layer.1
$region0: #{xlm_roberta_layer.1}
  #allocation0 [shape = 'u32[]', space=smem, size = 0x4, offset = 0x4, fixed_abs, tag = 'smem constant byte address 0x4 - core index']
  #allocation1 [shape = 'u32[144,128]{1,0:T(1,128)}', space=vmem, size = 0x12000, scoped, tag = 'internal scratch']
  %s0 = inlined_call_operand.vmem [shape: f32[2,8,32], index: 0, kind: input, shape index: {}]
  %s1 = inlined_call_operand.vmem [shape: bf16[32,96], index: 1, kind: input, shape index: {}]
  %s2 = inlined_call_operand.vmem [shape: bf16[32,32], index: 2, kind: input, shape index: {}]
  %s3 = inlined_call_operand.hbm [shape: bf16[32,64], index: 3, kind: input, shape index: {}]
  %s4 = inlined_call_operand.vmem [shape: bf16[64,32], index: 4, kind: input, shape index: {}]
  %s5 = inlined_call_operand.hbm [shape: f32[8,96], index: 5, kind: input, shape index: {}]
  %s6 = inlined_call_operand.hbm [shape: f32[2,8,32], index: 6, kind: output, shape index: {}]
  %s7 = sld [smem:[#allocation0]]
  $region65: #{xlm_roberta_layer.1} parent=0
    _
  %s9 = ssub.s32 1, %s7
  %s10 = scalar_select 0, %s9, %s7
  $region1: #{xlm_roberta_layer.1} parent=0
    #allocation2 [shape = 'u8[8192]{0}', space=vmem, size = 0x2000, scoped, tag = 'input window, operand 3, single buffered']
    #allocation3 [shape = 's32[2]{0}', space=sflag, size = 0x8, scoped, tag = 'scoped memory for xlm_roberta_layer.1']
    #allocation4 [shape = 's32[2]{0}', space=sflag, size = 0x8, scoped, tag = 'scoped memory for xlm_roberta_layer.1']
    #allocation5 [shape = 'u8[4096]{0}', space=vmem, size = 0x1000, scoped, tag = 'input window, operand 5, single buffered']
    #allocation6 [shape = 's32[1]{0}', space=sflag, size = 0x4, scoped, tag = 'scoped memory for xlm_roberta_layer.1']
    #allocation7 [shape = 'u8[8192]{0}', space=vmem, size = 0x2000, scoped, tag = 'output window, operand 0']
    %11 = vsyncpa [#allocation3], 0
    %12 = vsyncpa [#allocation6], 0
    %13 = vsyncpa [#allocation4], 0
    %s14 = scalar_lea.sflag [#allocation4], 1
    %15 = vsyncpa %s14, 0
    loop: start=0, step=1, limit=4
    $region2: #{xlm_roberta_layer.1} parent=1 // loop_pre_header
      _
    $region3: #{xlm_roberta_layer.1} parent=1 // loop_header
      %s17 = sphi 0, %s21
      %p18 = scmp.ge.s32.totalorder %s17, 4
      %s27 = sphi 0, %s29
      %s30 = sphi 0, %s27
      %s31 = sphi 0, %s30
      %s47 = sphi 0, %s31
      %s51 = sphi 0, %s51
      %s53 = sphi 0, %s51
      %s54 = sphi 0, %s53
      %s68 = sphi 0, %s54
      %s72 = sphi 0, %s72
      %s74 = sphi 0, %s72
      %s75 = sphi 0, %s74
      %s89 = sphi 0, %s75
      %s93 = sphi 0, %s93
      %s95 = sphi 0, %s93
      %s96 = sphi 0, %s95
      %s110 = sphi 0, %s96
      %s114 = sphi 0, %s114
      %s116 = sphi 0, %s114
      %s117 = sphi 0, %s116
      %s131 = sphi 0, %s117
      %s135 = sphi 0, %s135
      %s137 = sphi 0, %s135
      %s138 = sphi 0, %s137
      %s152 = sphi 0, %s138
      %s158 = sphi 0, %s160
      %s161 = sphi 0, %s158
      %s162 = sphi 0, %s161
      %s178 = sphi 0, %s162
    $region4: #{xlm_roberta_layer.1} parent=1 // loop_header_branch
      %20 = sbr.rel (%p18) target = $region8
    $region5: #{xlm_roberta_layer.1} parent=1 // loop_body
      %s22 = ssub.s32 %s17, 1
      %s23 = ssub.s32 %s17, 2
      %s24 = sadd.s32 %s17, 1
      %s25 = ssub.s32 %s17, %s24
      %p26 = scmp.eq.s32.totalorder %s25, 0
      %s28 = sadd.s32 %s27, 1
      %s29 = scalar_select %p26, %s27, %s28
      %p32 = pneg %p26
      %p33 = scmp.eq.s32.totalorder %s17, 1
      %p34 = por %p32, %p33
      %p35 = scmp.ne.s32.totalorder %s27, %s30
      %p36 = scmp.eq.s32.totalorder %s17, 0
      %p37 = por %p35, %p36
      %p38 = scmp.ne.s32.totalorder %s27, %s30
      %p39 = scmp.eq.s32.totalorder %s22, 1
      %p40 = por %p38, %p39
      %p41 = scmp.ne.s32.totalorder %s30, %s31
      %p42 = scmp.eq.s32.totalorder %s22, 0
      %p43 = por %p41, %p42
      %p44 = scmp.ne.s32.totalorder %s30, %s31
      %p45 = scmp.eq.s32.totalorder %s23, 1
      %p46 = por %p44, %p45
      %p48 = scmp.ne.s32.totalorder %s31, %s47
      %p49 = scmp.eq.s32.totalorder %s23, 0
      %p50 = por %p48, %p49
      %s52 = sadd.s32 %s51, 1
      %p55 = scmp.eq.s32.totalorder %s17, 1
      %p56 = scmp.ne.s32.totalorder %s51, %s53
      %p57 = scmp.eq.s32.totalorder %s17, 0
      %p58 = por %p56, %p57
      %p59 = scmp.ne.s32.totalorder %s51, %s53
      %p60 = scmp.eq.s32.totalorder %s22, 1
      %p61 = por %p59, %p60
      %p62 = scmp.ne.s32.totalorder %s53, %s54
      %p63 = scmp.eq.s32.totalorder %s22, 0
      %p64 = por %p62, %p63
      %p65 = scmp.ne.s32.totalorder %s53, %s54
      %p66 = scmp.eq.s32.totalorder %s23, 1
      %p67 = por %p65, %p66
      %p69 = scmp.ne.s32.totalorder %s54, %s68
      %p70 = scmp.eq.s32.totalorder %s23, 0
      %p71 = por %p69, %p70
      %s73 = sadd.s32 %s72, 1
      %p76 = scmp.eq.s32.totalorder %s17, 1
      %p77 = scmp.ne.s32.totalorder %s72, %s74
      %p78 = scmp.eq.s32.totalorder %s17, 0
      %p79 = por %p77, %p78
      %p80 = scmp.ne.s32.totalorder %s72, %s74
      %p81 = scmp.eq.s32.totalorder %s22, 1
      %p82 = por %p80, %p81
      %p83 = scmp.ne.s32.totalorder %s74, %s75
      %p84 = scmp.eq.s32.totalorder %s22, 0
      %p85 = por %p83, %p84
      %p86 = scmp.ne.s32.totalorder %s74, %s75
      %p87 = scmp.eq.s32.totalorder %s23, 1
      %p88 = por %p86, %p87
      %p90 = scmp.ne.s32.totalorder %s75, %s89
      %p91 = scmp.eq.s32.totalorder %s23, 0
      %p92 = por %p90, %p91
      %s94 = sadd.s32 %s93, 1
      %p97 = scmp.eq.s32.totalorder %s17, 1
      %p98 = scmp.ne.s32.totalorder %s93, %s95
      %p99 = scmp.eq.s32.totalorder %s17, 0
      %p100 = por %p98, %p99
      %p101 = scmp.ne.s32.totalorder %s93, %s95
      %p102 = scmp.eq.s32.totalorder %s22, 1
      %p103 = por %p101, %p102
      %p104 = scmp.ne.s32.totalorder %s95, %s96
      %p105 = scmp.eq.s32.totalorder %s22, 0
      %p106 = por %p104, %p105
      %p107 = scmp.ne.s32.totalorder %s95, %s96
      %p108 = scmp.eq.s32.totalorder %s23, 1
      %p109 = por %p107, %p108
      %p111 = scmp.ne.s32.totalorder %s96, %s110
      %p112 = scmp.eq.s32.totalorder %s23, 0
      %p113 = por %p111, %p112
      %s115 = sadd.s32 %s114, 1
      %p118 = scmp.eq.s32.totalorder %s17, 1
      %p119 = scmp.ne.s32.totalorder %s114, %s116
      %p120 = scmp.eq.s32.totalorder %s17, 0
      %p121 = por %p119, %p120
      %p122 = scmp.ne.s32.totalorder %s114, %s116
      %p123 = scmp.eq.s32.totalorder %s22, 1
      %p124 = por %p122, %p123
      %p125 = scmp.ne.s32.totalorder %s116, %s117
      %p126 = scmp.eq.s32.totalorder %s22, 0
      %p127 = por %p125, %p126
      %p128 = scmp.ne.s32.totalorder %s116, %s117
      %p129 = scmp.eq.s32.totalorder %s23, 1
      %p130 = por %p128, %p129
      %p132 = scmp.ne.s32.totalorder %s117, %s131
      %p133 = scmp.eq.s32.totalorder %s23, 0
      %p134 = por %p132, %p133
      %s136 = sadd.s32 %s135, 1
      %p139 = scmp.eq.s32.totalorder %s17, 1
      %p140 = scmp.ne.s32.totalorder %s135, %s137
      %p141 = scmp.eq.s32.totalorder %s17, 0
      %p142 = por %p140, %p141
      %p143 = scmp.ne.s32.totalorder %s135, %s137
      %p144 = scmp.eq.s32.totalorder %s22, 1
      %p145 = por %p143, %p144
      %p146 = scmp.ne.s32.totalorder %s137, %s138
      %p147 = scmp.eq.s32.totalorder %s22, 0
      %p148 = por %p146, %p147
      %p149 = scmp.ne.s32.totalorder %s137, %s138
      %p150 = scmp.eq.s32.totalorder %s23, 1
      %p151 = por %p149, %p150
      %p153 = scmp.ne.s32.totalorder %s138, %s152
      %p154 = scmp.eq.s32.totalorder %s23, 0
      %p155 = por %p153, %p154
      %s156 = ssub.s32 %s17, %s24
      %p157 = scmp.eq.s32.totalorder %s156, 0
      %s159 = sadd.s32 %s158, 1
      %s160 = scalar_select %p157, %s158, %s159
      %p163 = pneg %p157
      %p164 = scmp.eq.s32.totalorder %s17, 1
      %p165 = por %p163, %p164
      %p166 = scmp.ne.s32.totalorder %s158, %s161
      %p167 = scmp.eq.s32.totalorder %s17, 0
      %p168 = por %p166, %p167
      %p169 = scmp.ne.s32.totalorder %s158, %s161
      %p170 = scmp.eq.s32.totalorder %s22, 1
      %p171 = por %p169, %p170
      %p172 = scmp.ne.s32.totalorder %s161, %s162
      %p173 = scmp.eq.s32.totalorder %s22, 0
      %p174 = por %p172, %p173
      %p175 = scmp.ne.s32.totalorder %s161, %s162
      %p176 = scmp.eq.s32.totalorder %s23, 1
      %p177 = por %p175, %p176
      %p179 = scmp.ne.s32.totalorder %s162, %s178
      %p180 = scmp.eq.s32.totalorder %s23, 0
      %p181 = por %p179, %p180
      %p182 = scmp.le.s32.totalorder 1, %s17
      %p183 = scmp.lt.s32.totalorder %s17, 3
      %p184 = pnand %p182, %p183
      %p185 = pneg %p184
      // Predicated region
      $region9: #{xlm_roberta_layer.1} parent=5 // pred_check
        _
      $region10: #{xlm_roberta_layer.1} parent=5 // pred_check_branch
        %187 = sbr.rel (%p184) target = $region12
      $region11: #{xlm_roberta_layer.1} parent=5 // pred_region
        %s188 = ssub.s32 %s17, 1
        // Predicated region
        $region13: #{xlm_roberta_layer.1} parent=11 // pred_check
          %p189 = pneg %p64
        $region14: #{xlm_roberta_layer.1} parent=11 // pred_check_branch
          %191 = sbr.rel (%p189) target = $region16
        $region15: #{xlm_roberta_layer.1} parent=11 // pred_region
          _
        $region16: #{xlm_roberta_layer.1} parent=11 // pred_fallthru
          _
        // Predicated region
        $region17: #{xlm_roberta_layer.1} parent=11 // pred_check
          %p192 = pneg %p85
        $region18: #{xlm_roberta_layer.1} parent=11 // pred_check_branch
          %194 = sbr.rel (%p192) target = $region20
        $region19: #{xlm_roberta_layer.1} parent=11 // pred_region
          _
        $region20: #{xlm_roberta_layer.1} parent=11 // pred_fallthru
          _
        // Predicated region
        $region21: #{xlm_roberta_layer.1} parent=11 // pred_check
          %p195 = pneg %p106
        $region22: #{xlm_roberta_layer.1} parent=11 // pred_check_branch
          %197 = sbr.rel (%p195) target = $region24
        $region23: #{xlm_roberta_layer.1} parent=11 // pred_region
          %s199 = ssub.s32 256, 256
          %200 = vsyncadd [#allocation3], %s199
          %s201 = sshll.u32 [#allocation2], 4
          %s202 = int_to_ptr.vmem [resolvable:$true] %s201
          %207 = dma.hbm_to_vmem [thread:$0]  %s3, 256, %s202, [#allocation3], 64, 64, 4
        $region24: #{xlm_roberta_layer.1} parent=11 // pred_fallthru
          _
        // Predicated region
        $region25: #{xlm_roberta_layer.1} parent=11 // pred_check
          %p208 = pneg %p127
        $region26: #{xlm_roberta_layer.1} parent=11 // pred_check_branch
          %210 = sbr.rel (%p208) target = $region28
        $region27: #{xlm_roberta_layer.1} parent=11 // pred_region
          _
        $region28: #{xlm_roberta_layer.1} parent=11 // pred_fallthru
          _
        // Predicated region
        $region29: #{xlm_roberta_layer.1} parent=11 // pred_check
          %p211 = pneg %p148
        $region30: #{xlm_roberta_layer.1} parent=11 // pred_check_branch
          %213 = sbr.rel (%p211) target = $region32
        $region31: #{xlm_roberta_layer.1} parent=11 // pred_region
          %s215 = ssub.s32 128, 128
          %216 = vsyncadd [#allocation6], %s215
          %s218 = sshll.u32 [#allocation5], 4
          %s219 = int_to_ptr.vmem [resolvable:$true] %s218
          %221 = dma.hbm_to_vmem [thread:$0]  %s5, 128, %s219, [#allocation6]
        $region32: #{xlm_roberta_layer.1} parent=11 // pred_fallthru
          _
      $region12: #{xlm_roberta_layer.1} parent=5 // pred_fallthru
        _
      %p222 = scmp.lt.s32.totalorder %s17, 2
      // Predicated region
      $region33: #{xlm_roberta_layer.1} parent=5 // pred_check
        %p223 = pneg %p222
      $region34: #{xlm_roberta_layer.1} parent=5 // pred_check_branch
        %225 = sbr.rel (%p223) target = $region36
      $region35: #{xlm_roberta_layer.1} parent=5 // pred_region
        // Predicated region
        $region37: #{xlm_roberta_layer.1} parent=35 // pred_check
          %p226 = pneg %p37
        $region38: #{xlm_roberta_layer.1} parent=35 // pred_check_branch
          %228 = sbr.rel (%p226) target = $region40
        $region39: #{xlm_roberta_layer.1} parent=35 // pred_region
          %p229 = scmp.lt.s32.totalorder %s17, 1
          %s230 = scalar_select %p229, %s17, 1
          %s231 = smul.addr %s230, 8
          %s232 = scalar_lea.vmem %s0, %s231
        $region40: #{xlm_roberta_layer.1} parent=35 // pred_fallthru
          _
      $region36: #{xlm_roberta_layer.1} parent=5 // pred_fallthru
        _
      %p233 = scmp.le.s32.totalorder 1, %s17
      %p234 = scmp.lt.s32.totalorder %s17, 3
      %p235 = pnand %p233, %p234
      %p236 = pneg %p235
      // Predicated region
      $region41: #{xlm_roberta_layer.1} parent=5 // pred_check
        _
      $region42: #{xlm_roberta_layer.1} parent=5 // pred_check_branch
        %238 = sbr.rel (%p235) target = $region44
      $region43: #{xlm_roberta_layer.1} parent=5 // pred_region
        %s239 = ssub.s32 %s17, 1
        // Predicated region
        $region45: #{xlm_roberta_layer.1} parent=43 // pred_check
          %p240 = pneg %p106
        $region46: #{xlm_roberta_layer.1} parent=43 // pred_check_branch
          %242 = sbr.rel (%p240) target = $region48
        $region47: #{xlm_roberta_layer.1} parent=43 // pred_region
          %243 = dma.done [#allocation3], 256
        $region48: #{xlm_roberta_layer.1} parent=43 // pred_fallthru
          _
        // Predicated region
        $region49: #{xlm_roberta_layer.1} parent=43 // pred_check
          %p244 = pneg %p148
        $region50: #{xlm_roberta_layer.1} parent=43 // pred_check_branch
          %246 = sbr.rel (%p244) target = $region52
        $region51: #{xlm_roberta_layer.1} parent=43 // pred_region
          %247 = dma.done [#allocation6], 128
        $region52: #{xlm_roberta_layer.1} parent=43 // pred_fallthru
          _
        %p248 = scmp.lt.s32.totalorder %s22, 1
        %s249 = scalar_select %p248, %s22, 1
        %s250 = smul.addr %s249, 8
        %s251 = scalar_lea.vmem %s0, %s250
        %p252 = pneg %p43
        %p253 = pneg %p40
        %p254 = pneg %p64
        %p255 = pneg %p61
        %p256 = pneg %p85
        %p257 = pneg %p82
        %p258 = pneg %p106
        %p259 = pneg %p103
        %p260 = pneg %p127
        %p261 = pneg %p124
        %p262 = pneg %p148
        %p263 = pneg %p145
        %p264 = pneg %p174
        %p265 = pneg %p171
        %s266 = sand.u32 %s161, 1
        %s267 = scalar_lea.sflag [#allocation4], %s266
        %s268 = sand.u32 %s161, 1
        %s269 = smul.addr %s268, 8
        %s270 = scalar_lea.vmem [#allocation7], %s269
        %p271 = scmp.lt.s32.totalorder %s22, 1
        %s272 = scalar_select %p271, %s22, 1
        %s273 = smul.addr %s272, 8
        %s274 = scalar_lea.vmem %s0, %s273
        %v276 = vld [vmem:[#allocation5] sm:$0xff]
        %v277 = vld [vmem:[%s274] sm:$0xff]
        %v278 = vpack.c.bf16 %v277, %v277
        %v279 = vld [vmem:[%s1] sm:$0xf]
        %v280 = vld [vmem:[%s1 + $0x4] sm:$0xf]
        %v281 = vld [vmem:[%s1 + $0x8] sm:$0xf]
        %v282 = vld [vmem:[%s1 + $0xc] sm:$0xf]
        %v283 = vlaneseq
        %v284 = vshrl.u32 %v283, 7
        %v285 = vsub.s32 0, %v284
        %v286 = vrot.slane %v276, %v285
        %v291 = vunpack.c.l.b16 %v279
        %v292 = vunpack.c.l.b16 %v280
        %v293 = vunpack.c.l.b16 %v281
        %v294 = vunpack.c.l.b16 %v282
        %v295 = vpack.c.b16 %v292, %v291
        %v296 = vpack.c.b16 %v294, %v293
        %vm299 = vcmask 261120
        %v301 = vsel %vm299, %v278, 0
        %303 = vmatprep.subr.bf16.mxu0 0
        %304 = vmatpush1.bf16.msra.mxu0 0
        %305 = vmatprep.subr.bf16.mxu0 0
        %306 = vmatpush1.bf16.msra.mxu0 0
        %307 = vmatprep.subr.bf16.mxu0 0
        %308 = vmatpush1.bf16.msra.mxu0 0
        %309 = vmatprep.subr.bf16.mxu0 0
        %310 = vmatpush1.bf16.msra.mxu0 0
        %311 = vmatprep.subr.bf16.mxu0 0
        %312 = vmatpush1.bf16.msra.mxu0 0
        %313 = vmatprep.subr.bf16.mxu0 0
        %314 = vmatpush1.bf16.msra.mxu0 0
        %315 = vmatprep.subr.bf16.mxu0 0
        %316 = vmatpush1.bf16.msra.mxu0 %v296
        %317 = vmatprep.subr.bf16.mxu0 0
        %318 = vmatpush1.bf16.msra.mxu0 %v295
        %319 = vmatprep.subr.bf16.mxu0 0
        %320 = vmatpush2.bf16.msra.mxu0 0
        %321 = vmatprep.subr.bf16.mxu0 0
        %322 = vmatpush2.bf16.msra.mxu0 0
        %323 = vmatprep.subr.bf16.mxu0 0
        %324 = vmatpush2.bf16.msra.mxu0 0
        %325 = vmatprep.subr.bf16.mxu0 0
        %326 = vmatpush2.bf16.msra.mxu0 0
        %327 = vmatprep.subr.bf16.mxu0 0
        %328 = vmatpush2.bf16.msra.mxu0 0
        %329 = vmatprep.subr.bf16.mxu0 0
        %330 = vmatpush2.bf16.msra.mxu0 0
        %331 = vmatprep.subr.bf16.mxu0 0
        %332 = vmatpush2.bf16.msra.mxu0 0
        %333 = vmatprep.subr.bf16.mxu0 0
        %334 = vmatpush2.bf16.msra.mxu0 0
        %335 = vmatprep.mubr.bf16.mxu0 0
        %336 = vmatmul.mubr.bf16.gmra.mxu0 %v301
        %v337 = vpop.f32.mrf.mxu0
        %v338 = vadd.f32 %v286, %v337
        %v339 = vpop.f32.mrf.mxu0
        %v340 = vpop.f32.mrf.mxu0
        %v341 = vpop.f32.mrf.mxu0
        %342 = vdwg.mxu0
        %v343 = vpack.c.bf16 %v338, %v338
        %345 = vrot.lane.b32.xlu0 %v343, 120
        %v346 = vpop.permute.xlu0 %345
        %347 = vrot.lane.b32.xlu0 %v343, 112
        %v348 = vpop.permute.xlu0 %347
        %349 = vrot.lane.b32.xlu0 %v343, 104
        %v350 = vpop.permute.xlu0 %349
        %351 = vrot.lane.b32.xlu0 %v343, 96
        %v352 = vpop.permute.xlu0 %351
        %353 = vrot.lane.b32.xlu0 %v346, 96
        %v354 = vpop.permute.xlu0 %353
        %355 = vrot.lane.b32.xlu0 %v348, 96
        %v356 = vpop.permute.xlu0 %355
        %357 = vrot.lane.b32.xlu0 %v350, 96
        %v358 = vpop.permute.xlu0 %357
        %363 = vxpose.xlu0.c.b16.start [1/8] %v352, 128
        %364 = vxpose.xlu0.c.b16.cont [2/8] 0, 128
        %365 = vxpose.xlu0.c.b16.cont [3/8] 0, 128
        %366 = vxpose.xlu0.c.b16.cont [4/8] 0, 128
        %367 = vxpose.xlu0.c.b16.cont [5/8] 0, 128
        %368 = vxpose.xlu0.c.b16.cont [6/8] 0, 128
        %369 = vxpose.xlu0.c.b16.cont [7/8] 0, 128
        %370 = vxpose.xlu0.c.b16.end [8/8] 0, 128
        %v371 = vpop.trf.xlu0
        %v372 = vpop.trf.xlu0
        %v373 = vpop.trf.xlu0
        %v374 = vpop.trf.xlu0
        %v375 = vpop.trf.xlu0
        %v376 = vpop.trf.xlu0
        %v377 = vpop.trf.xlu0
        %v378 = vpop.trf.xlu0
        %379 = vxpose.xlu0.c.b16.start [1/8] %v354, 128
        %380 = vxpose.xlu0.c.b16.cont [2/8] 0, 128
        %381 = vxpose.xlu0.c.b16.cont [3/8] 0, 128
        %382 = vxpose.xlu0.c.b16.cont [4/8] 0, 128
        %383 = vxpose.xlu0.c.b16.cont [5/8] 0, 128
        %384 = vxpose.xlu0.c.b16.cont [6/8] 0, 128
        %385 = vxpose.xlu0.c.b16.cont [7/8] 0, 128
        %386 = vxpose.xlu0.c.b16.end [8/8] 0, 128
        %v387 = vpop.trf.xlu0
        %v388 = vpop.trf.xlu0
        %v389 = vpop.trf.xlu0
        %v390 = vpop.trf.xlu0
        %v391 = vpop.trf.xlu0
        %v392 = vpop.trf.xlu0
        %v393 = vpop.trf.xlu0
        %v394 = vpop.trf.xlu0
        %395 = vxpose.xlu0.c.b16.start [1/8] %v356, 128
        %396 = vxpose.xlu0.c.b16.cont [2/8] 0, 128
        %397 = vxpose.xlu0.c.b16.cont [3/8] 0, 128
        %398 = vxpose.xlu0.c.b16.cont [4/8] 0, 128
        %399 = vxpose.xlu0.c.b16.cont [5/8] 0, 128
        %400 = vxpose.xlu0.c.b16.cont [6/8] 0, 128
        %401 = vxpose.xlu0.c.b16.cont [7/8] 0, 128
        %402 = vxpose.xlu0.c.b16.end [8/8] 0, 128
        %v403 = vpop.trf.xlu0
        %v404 = vpop.trf.xlu0
        %v405 = vpop.trf.xlu0
        %v406 = vpop.trf.xlu0
        %v407 = vpop.trf.xlu0
        %v408 = vpop.trf.xlu0
        %v409 = vpop.trf.xlu0
        %v410 = vpop.trf.xlu0
        %411 = vxpose.xlu0.c.b16.start [1/8] %v358, 128
        %412 = vxpose.xlu0.c.b16.cont [2/8] 0, 128
        %413 = vxpose.xlu0.c.b16.cont [3/8] 0, 128
        %414 = vxpose.xlu0.c.b16.cont [4/8] 0, 128
        %415 = vxpose.xlu0.c.b16.cont [5/8] 0, 128
        %416 = vxpose.xlu0.c.b16.cont [6/8] 0, 128
        %417 = vxpose.xlu0.c.b16.cont [7/8] 0, 128
        %418 = vxpose.xlu0.c.b16.end [8/8] 0, 128
        %v419 = vpop.trf.xlu0
        %v420 = vpop.trf.xlu0
        %v421 = vpop.trf.xlu0
        %v422 = vpop.trf.xlu0
        %v423 = vpop.trf.xlu0
        %v424 = vpop.trf.xlu0
        %v425 = vpop.trf.xlu0
        %v426 = vpop.trf.xlu0
        %vm427 = vcmask 64512
        %v429 = vsel %vm427, %v343, 0
        %vm431 = vcmask 1043456
        %v433 = vsel %vm431, %v371, 0
        %435 = vmatprep.subr.bf16.mxu0 0
        %436 = vmatpush1.bf16.msra.mxu0 0
        %437 = vmatprep.subr.bf16.mxu0 0
        %438 = vmatpush1.bf16.msra.mxu0 0
        %439 = vmatprep.subr.bf16.mxu0 0
        %440 = vmatpush1.bf16.msra.mxu0 0
        %441 = vmatprep.subr.bf16.mxu0 0
        %442 = vmatpush1.bf16.msra.mxu0 0
        %443 = vmatprep.subr.bf16.mxu0 0
        %444 = vmatpush1.bf16.msra.mxu0 0
        %445 = vmatprep.subr.bf16.mxu0 0
        %446 = vmatpush1.bf16.msra.mxu0 0
        %447 = vmatprep.subr.bf16.mxu0 0
        %448 = vmatpush1.bf16.msra.mxu0 0
        %449 = vmatprep.subr.bf16.mxu0 0
        %450 = vmatpush1.bf16.msra.mxu0 %v433
        %451 = vmatprep.subr.bf16.mxu0 0
        %452 = vmatpush2.bf16.msra.mxu0 0
        %453 = vmatprep.subr.bf16.mxu0 0
        %454 = vmatpush2.bf16.msra.mxu0 0
        %455 = vmatprep.subr.bf16.mxu0 0
        %456 = vmatpush2.bf16.msra.mxu0 0
        %457 = vmatprep.subr.bf16.mxu0 0
        %458 = vmatpush2.bf16.msra.mxu0 0
        %459 = vmatprep.subr.bf16.mxu0 0
        %460 = vmatpush2.bf16.msra.mxu0 0
        %461 = vmatprep.subr.bf16.mxu0 0
        %462 = vmatpush2.bf16.msra.mxu0 0
        %463 = vmatprep.subr.bf16.mxu0 0
        %464 = vmatpush2.bf16.msra.mxu0 0
        %465 = vmatprep.subr.bf16.mxu0 0
        %466 = vmatpush2.bf16.msra.mxu0 0
        %467 = vmatprep.mubr.bf16.mxu0 0
        %468 = vmatmul.mubr.bf16.gmra.mxu0 %v429
        %v469 = vpop.f32.mrf.mxu0
        %v470 = vadd.f32 0.0, %v469
        %v471 = vpop.f32.mrf.mxu0
        %v472 = vpop.f32.mrf.mxu0
        %v473 = vpop.f32.mrf.mxu0
        %474 = vdwg.mxu0
        %v476 = vsel %vm427, %v346, 0
        %v479 = vsel %vm431, %v387, 0
        %481 = vmatprep.subr.bf16.mxu0 0
        %482 = vmatpush1.bf16.msra.mxu0 0
        %483 = vmatprep.subr.bf16.mxu0 0
        %484 = vmatpush1.bf16.msra.mxu0 0
        %485 = vmatprep.subr.bf16.mxu0 0
        %486 = vmatpush1.bf16.msra.mxu0 0
        %487 = vmatprep.subr.bf16.mxu0 0
        %488 = vmatpush1.bf16.msra.mxu0 0
        %489 = vmatprep.subr.bf16.mxu0 0
        %490 = vmatpush1.bf16.msra.mxu0 0
        %491 = vmatprep.subr.bf16.mxu0 0
        %492 = vmatpush1.bf16.msra.mxu0 0
        %493 = vmatprep.subr.bf16.mxu0 0
        %494 = vmatpush1.bf16.msra.mxu0 0
        %495 = vmatprep.subr.bf16.mxu0 0
        %496 = vmatpush1.bf16.msra.mxu0 %v479
        %497 = vmatprep.subr.bf16.mxu0 0
        %498 = vmatpush2.bf16.msra.mxu0 0
        %499 = vmatprep.subr.bf16.mxu0 0
        %500 = vmatpush2.bf16.msra.mxu0 0
        %501 = vmatprep.subr.bf16.mxu0 0
        %502 = vmatpush2.bf16.msra.mxu0 0
        %503 = vmatprep.subr.bf16.mxu0 0
        %504 = vmatpush2.bf16.msra.mxu0 0
        %505 = vmatprep.subr.bf16.mxu0 0
        %506 = vmatpush2.bf16.msra.mxu0 0
        %507 = vmatprep.subr.bf16.mxu0 0
        %508 = vmatpush2.bf16.msra.mxu0 0
        %509 = vmatprep.subr.bf16.mxu0 0
        %510 = vmatpush2.bf16.msra.mxu0 0
        %511 = vmatprep.subr.bf16.mxu0 0
        %512 = vmatpush2.bf16.msra.mxu0 0
        %513 = vmatprep.mubr.bf16.mxu0 0
        %514 = vmatmul.mubr.bf16.gmra.mxu0 %v476
        %v515 = vpop.f32.mrf.mxu0
        %v516 = vadd.f32 0.0, %v515
        %v517 = vpop.f32.mrf.mxu0
        %v518 = vpop.f32.mrf.mxu0
        %v519 = vpop.f32.mrf.mxu0
        %520 = vdwg.mxu0
        %v522 = vsel %vm427, %v348, 0
        %v525 = vsel %vm431, %v403, 0
        %527 = vmatprep.subr.bf16.mxu0 0
        %528 = vmatpush1.bf16.msra.mxu0 0
        %529 = vmatprep.subr.bf16.mxu0 0
        %530 = vmatpush1.bf16.msra.mxu0 0
        %531 = vmatprep.subr.bf16.mxu0 0
        %532 = vmatpush1.bf16.msra.mxu0 0
        %533 = vmatprep.subr.bf16.mxu0 0
        %534 = vmatpush1.bf16.msra.mxu0 0
        %535 = vmatprep.subr.bf16.mxu0 0
        %536 = vmatpush1.bf16.msra.mxu0 0
        %537 = vmatprep.subr.bf16.mxu0 0
        %538 = vmatpush1.bf16.msra.mxu0 0
        %539 = vmatprep.subr.bf16.mxu0 0
        %540 = vmatpush1.bf16.msra.mxu0 0
        %541 = vmatprep.subr.bf16.mxu0 0
        %542 = vmatpush1.bf16.msra.mxu0 %v525
        %543 = vmatprep.subr.bf16.mxu0 0
        %544 = vmatpush2.bf16.msra.mxu0 0
        %545 = vmatprep.subr.bf16.mxu0 0
        %546 = vmatpush2.bf16.msra.mxu0 0
        %547 = vmatprep.subr.bf16.mxu0 0
        %548 = vmatpush2.bf16.msra.mxu0 0
        %549 = vmatprep.subr.bf16.mxu0 0
        %550 = vmatpush2.bf16.msra.mxu0 0
        %551 = vmatprep.subr.bf16.mxu0 0
        %552 = vmatpush2.bf16.msra.mxu0 0
        %553 = vmatprep.subr.bf16.mxu0 0
        %554 = vmatpush2.bf16.msra.mxu0 0
        %555 = vmatprep.subr.bf16.mxu0 0
        %556 = vmatpush2.bf16.msra.mxu0 0
        %557 = vmatprep.subr.bf16.mxu0 0
        %558 = vmatpush2.bf16.msra.mxu0 0
        %559 = vmatprep.mubr.bf16.mxu0 0
        %560 = vmatmul.mubr.bf16.gmra.mxu0 %v522
        %v561 = vpop.f32.mrf.mxu0
        %v562 = vadd.f32 0.0, %v561
        %v563 = vpop.f32.mrf.mxu0
        %v564 = vpop.f32.mrf.mxu0
        %v565 = vpop.f32.mrf.mxu0
        %566 = vdwg.mxu0
        %v568 = vsel %vm427, %v350, 0
        %v571 = vsel %vm431, %v419, 0
        %573 = vmatprep.subr.bf16.mxu0 0
        %574 = vmatpush1.bf16.msra.mxu0 0
        %575 = vmatprep.subr.bf16.mxu0 0
        %576 = vmatpush1.bf16.msra.mxu0 0
        %577 = vmatprep.subr.bf16.mxu0 0
        %578 = vmatpush1.bf16.msra.mxu0 0
        %579 = vmatprep.subr.bf16.mxu0 0
        %580 = vmatpush1.bf16.msra.mxu0 0
        %581 = vmatprep.subr.bf16.mxu0 0
        %582 = vmatpush1.bf16.msra.mxu0 0
        %583 = vmatprep.subr.bf16.mxu0 0
        %584 = vmatpush1.bf16.msra.mxu0 0
        %585 = vmatprep.subr.bf16.mxu0 0
        %586 = vmatpush1.bf16.msra.mxu0 0
        %587 = vmatprep.subr.bf16.mxu0 0
        %588 = vmatpush1.bf16.msra.mxu0 %v571
        %589 = vmatprep.subr.bf16.mxu0 0
        %590 = vmatpush2.bf16.msra.mxu0 0
        %591 = vmatprep.subr.bf16.mxu0 0
        %592 = vmatpush2.bf16.msra.mxu0 0
        %593 = vmatprep.subr.bf16.mxu0 0
        %594 = vmatpush2.bf16.msra.mxu0 0
        %595 = vmatprep.subr.bf16.mxu0 0
        %596 = vmatpush2.bf16.msra.mxu0 0
        %597 = vmatprep.subr.bf16.mxu0 0
        %598 = vmatpush2.bf16.msra.mxu0 0
        %599 = vmatprep.subr.bf16.mxu0 0
        %600 = vmatpush2.bf16.msra.mxu0 0
        %601 = vmatprep.subr.bf16.mxu0 0
        %602 = vmatpush2.bf16.msra.mxu0 0
        %603 = vmatprep.subr.bf16.mxu0 0
        %604 = vmatpush2.bf16.msra.mxu0 0
        %605 = vmatprep.mubr.bf16.mxu0 0
        %606 = vmatmul.mubr.bf16.gmra.mxu0 %v568
        %v607 = vpop.f32.mrf.mxu0
        %v608 = vadd.f32 0.0, %v607
        %v609 = vpop.f32.mrf.mxu0
        %v610 = vpop.f32.mrf.mxu0
        %v611 = vpop.f32.mrf.mxu0
        %612 = vdwg.mxu0
        %v613 = vsel %vm427, %v470, -inf
        %614 = vmax.xlane.f32.xlu0 %v613
        %v615 = vpop.xlane.xlu0 %614
        %v616 = vsel %vm427, %v516, -inf
        %617 = vmax.xlane.f32.xlu0 %v616
        %v618 = vpop.xlane.xlu0 %617
        %v619 = vsel %vm427, %v562, -inf
        %620 = vmax.xlane.f32.xlu0 %v619
        %v621 = vpop.xlane.xlu0 %620
        %v622 = vsel %vm427, %v608, -inf
        %623 = vmax.xlane.f32.xlu0 %v622
        %v624 = vpop.xlane.xlu0 %623
        %v625 = vsub.f32 %v470, %v615
        %v626 = vsub.f32 %v516, %v618
        %v627 = vsub.f32 %v562, %v621
        %v628 = vsub.f32 %v608, %v624
        %v629 = vmul.f32 %v625, 1.442695
        %v630 = vpow.pop %v629
        %v631 = vmul.f32 %v626, 1.442695
        %v632 = vpow.pop %v631
        %v633 = vmul.f32 %v627, 1.442695
        %v634 = vpow.pop %v633
        %v635 = vmul.f32 %v628, 1.442695
        %v636 = vpow.pop %v635
        %v637 = vsel %vm427, %v630, 0.0
        %638 = vadd.xlane.f32.xlu0 %v637
        %v639 = vpop.xlane.xlu0 %638
        %v640 = vsel %vm427, %v632, 0.0
        %641 = vadd.xlane.f32.xlu0 %v640
        %v642 = vpop.xlane.xlu0 %641
        %v643 = vsel %vm427, %v634, 0.0
        %644 = vadd.xlane.f32.xlu0 %v643
        %v645 = vpop.xlane.xlu0 %644
        %v646 = vsel %vm427, %v636, 0.0
        %647 = vadd.xlane.f32.xlu0 %v646
        %v648 = vpop.xlane.xlu0 %647
        %v649 = vrcp.pop %v639
        %v650 = vrcp.pop %v642
        %v651 = vrcp.pop %v645
        %v652 = vrcp.pop %v648
        %v653 = vmul.f32 %v630, %v649
        %v654 = vmul.f32 %v632, %v650
        %v655 = vmul.f32 %v634, %v651
        %v656 = vmul.f32 %v636, %v652
        %v657 = vpack.c.bf16 %v653, %v653
        %v658 = vpack.c.bf16 %v654, %v654
        %v659 = vpack.c.bf16 %v655, %v655
        %v660 = vpack.c.bf16 %v656, %v656
        %661 = vrot.lane.b32.xlu0 %v343, 64
        %v662 = vpop.permute.xlu0 %661
        %663 = vrot.lane.b32.xlu0 %v346, 64
        %v664 = vpop.permute.xlu0 %663
        %665 = vrot.lane.b32.xlu0 %v348, 64
        %v666 = vpop.permute.xlu0 %665
        %667 = vrot.lane.b32.xlu0 %v350, 64
        %v668 = vpop.permute.xlu0 %667
        %673 = vxpose.xlu0.c.b16.start [1/8] %v662, 128
        %674 = vxpose.xlu0.c.b16.cont [2/8] 0, 128
        %675 = vxpose.xlu0.c.b16.cont [3/8] 0, 128
        %676 = vxpose.xlu0.c.b16.cont [4/8] 0, 128
        %677 = vxpose.xlu0.c.b16.cont [5/8] 0, 128
        %678 = vxpose.xlu0.c.b16.cont [6/8] 0, 128
        %679 = vxpose.xlu0.c.b16.cont [7/8] 0, 128
        %680 = vxpose.xlu0.c.b16.end [8/8] 0, 128
        %v681 = vpop.trf.xlu0
        %v682 = vpop.trf.xlu0
        %v683 = vpop.trf.xlu0
        %v684 = vpop.trf.xlu0
        %v685 = vpop.trf.xlu0
        %v686 = vpop.trf.xlu0
        %v687 = vpop.trf.xlu0
        %v688 = vpop.trf.xlu0
        %689 = vxpose.xlu0.c.b16.start [1/8] %v664, 128
        %690 = vxpose.xlu0.c.b16.cont [2/8] 0, 128
        %691 = vxpose.xlu0.c.b16.cont [3/8] 0, 128
        %692 = vxpose.xlu0.c.b16.cont [4/8] 0, 128
        %693 = vxpose.xlu0.c.b16.cont [5/8] 0, 128
        %694 = vxpose.xlu0.c.b16.cont [6/8] 0, 128
        %695 = vxpose.xlu0.c.b16.cont [7/8] 0, 128
        %696 = vxpose.xlu0.c.b16.end [8/8] 0, 128
        %v697 = vpop.trf.xlu0
        %v698 = vpop.trf.xlu0
        %v699 = vpop.trf.xlu0
        %v700 = vpop.trf.xlu0
        %v701 = vpop.trf.xlu0
        %v702 = vpop.trf.xlu0
        %v703 = vpop.trf.xlu0
        %v704 = vpop.trf.xlu0
        %705 = vxpose.xlu0.c.b16.start [1/8] %v666, 128
        %706 = vxpose.xlu0.c.b16.cont [2/8] 0, 128
        %707 = vxpose.xlu0.c.b16.cont [3/8] 0, 128
        %708 = vxpose.xlu0.c.b16.cont [4/8] 0, 128
        %709 = vxpose.xlu0.c.b16.cont [5/8] 0, 128
        %710 = vxpose.xlu0.c.b16.cont [6/8] 0, 128
        %711 = vxpose.xlu0.c.b16.cont [7/8] 0, 128
        %712 = vxpose.xlu0.c.b16.end [8/8] 0, 128
        %v713 = vpop.trf.xlu0
        %v714 = vpop.trf.xlu0
        %v715 = vpop.trf.xlu0
        %v716 = vpop.trf.xlu0
        %v717 = vpop.trf.xlu0
        %v718 = vpop.trf.xlu0
        %v719 = vpop.trf.xlu0
        %v720 = vpop.trf.xlu0
        %721 = vxpose.xlu0.c.b16.start [1/8] %v668, 128
        %722 = vxpose.xlu0.c.b16.cont [2/8] 0, 128
        %723 = vxpose.xlu0.c.b16.cont [3/8] 0, 128
        %724 = vxpose.xlu0.c.b16.cont [4/8] 0, 128
        %725 = vxpose.xlu0.c.b16.cont [5/8] 0, 128
        %726 = vxpose.xlu0.c.b16.cont [6/8] 0, 128
        %727 = vxpose.xlu0.c.b16.cont [7/8] 0, 128
        %728 = vxpose.xlu0.c.b16.end [8/8] 0, 128
        %v729 = vpop.trf.xlu0
        %v730 = vpop.trf.xlu0
        %v731 = vpop.trf.xlu0
        %v732 = vpop.trf.xlu0
        %v733 = vpop.trf.xlu0
        %v734 = vpop.trf.xlu0
        %v735 = vpop.trf.xlu0
        %v736 = vpop.trf.xlu0
        %v738 = vsel %vm427, %v681, 0
        %v741 = vsel %vm427, %v657, 0
        %743 = vmatprep.subr.bf16.mxu0 0
        %744 = vmatpush1.bf16.xpose.msra.mxu0 0
        %745 = vmatprep.subr.bf16.mxu0 0
        %746 = vmatpush1.bf16.xpose.msra.mxu0 0
        %747 = vmatprep.subr.bf16.mxu0 0
        %748 = vmatpush1.bf16.xpose.msra.mxu0 0
        %749 = vmatprep.subr.bf16.mxu0 0
        %750 = vmatpush1.bf16.xpose.msra.mxu0 0
        %751 = vmatprep.subr.bf16.mxu0 0
        %752 = vmatpush1.bf16.xpose.msra.mxu0 0
        %753 = vmatprep.subr.bf16.mxu0 0
        %754 = vmatpush1.bf16.xpose.msra.mxu0 0
        %755 = vmatprep.subr.bf16.mxu0 0
        %756 = vmatpush1.bf16.xpose.msra.mxu0 0
        %757 = vmatprep.subr.bf16.mxu0 0
        %758 = vmatpush1.bf16.xpose.msra.mxu0 %v741
        %759 = vmatprep.subr.bf16.mxu0 0
        %760 = vmatpush2.bf16.xpose.msra.mxu0 0
        %761 = vmatprep.subr.bf16.mxu0 0
        %762 = vmatpush2.bf16.xpose.msra.mxu0 0
        %763 = vmatprep.subr.bf16.mxu0 0
        %764 = vmatpush2.bf16.xpose.msra.mxu0 0
        %765 = vmatprep.subr.bf16.mxu0 0
        %766 = vmatpush2.bf16.xpose.msra.mxu0 0
        %767 = vmatprep.subr.bf16.mxu0 0
        %768 = vmatpush2.bf16.xpose.msra.mxu0 0
        %769 = vmatprep.subr.bf16.mxu0 0
        %770 = vmatpush2.bf16.xpose.msra.mxu0 0
        %771 = vmatprep.subr.bf16.mxu0 0
        %772 = vmatpush2.bf16.xpose.msra.mxu0 0
        %773 = vmatprep.subr.bf16.mxu0 0
        %774 = vmatpush2.bf16.xpose.msra.mxu0 0
        %775 = vmatprep.mubr.bf16.mxu0 0
        %776 = vmatmul.mubr.bf16.gmra.mxu0 %v738
        %v777 = vpop.f32.mrf.mxu0
        %v778 = vadd.f32 0.0, %v777
        %v779 = vpop.f32.mrf.mxu0
        %v780 = vpop.f32.mrf.mxu0
        %v781 = vpop.f32.mrf.mxu0
        %782 = vdwg.mxu0
        %v784 = vsel %vm427, %v697, 0
        %v787 = vsel %vm427, %v658, 0
        %789 = vmatprep.subr.bf16.mxu0 0
        %790 = vmatpush1.bf16.xpose.msra.mxu0 0
        %791 = vmatprep.subr.bf16.mxu0 0
        %792 = vmatpush1.bf16.xpose.msra.mxu0 0
        %793 = vmatprep.subr.bf16.mxu0 0
        %794 = vmatpush1.bf16.xpose.msra.mxu0 0
        %795 = vmatprep.subr.bf16.mxu0 0
        %796 = vmatpush1.bf16.xpose.msra.mxu0 0
        %797 = vmatprep.subr.bf16.mxu0 0
        %798 = vmatpush1.bf16.xpose.msra.mxu0 0
        %799 = vmatprep.subr.bf16.mxu0 0
        %800 = vmatpush1.bf16.xpose.msra.mxu0 0
        %801 = vmatprep.subr.bf16.mxu0 0
        %802 = vmatpush1.bf16.xpose.msra.mxu0 0
        %803 = vmatprep.subr.bf16.mxu0 0
        %804 = vmatpush1.bf16.xpose.msra.mxu0 %v787
        %805 = vmatprep.subr.bf16.mxu0 0
        %806 = vmatpush2.bf16.xpose.msra.mxu0 0
        %807 = vmatprep.subr.bf16.mxu0 0
        %808 = vmatpush2.bf16.xpose.msra.mxu0 0
        %809 = vmatprep.subr.bf16.mxu0 0
        %810 = vmatpush2.bf16.xpose.msra.mxu0 0
        %811 = vmatprep.subr.bf16.mxu0 0
        %812 = vmatpush2.bf16.xpose.msra.mxu0 0
        %813 = vmatprep.subr.bf16.mxu0 0
        %814 = vmatpush2.bf16.xpose.msra.mxu0 0
        %815 = vmatprep.subr.bf16.mxu0 0
        %816 = vmatpush2.bf16.xpose.msra.mxu0 0
        %817 = vmatprep.subr.bf16.mxu0 0
        %818 = vmatpush2.bf16.xpose.msra.mxu0 0
        %819 = vmatprep.subr.bf16.mxu0 0
        %820 = vmatpush2.bf16.xpose.msra.mxu0 0
        %821 = vmatprep.mubr.bf16.mxu0 0
        %822 = vmatmul.mubr.bf16.gmra.mxu0 %v784
        %v823 = vpop.f32.mrf.mxu0
        %v824 = vadd.f32 0.0, %v823
        %v825 = vpop.f32.mrf.mxu0
        %v826 = vpop.f32.mrf.mxu0
        %v827 = vpop.f32.mrf.mxu0
        %828 = vdwg.mxu0
        %v830 = vsel %vm427, %v713, 0
        %v833 = vsel %vm427, %v659, 0
        %835 = vmatprep.subr.bf16.mxu0 0
        %836 = vmatpush1.bf16.xpose.msra.mxu0 0
        %837 = vmatprep.subr.bf16.mxu0 0
        %838 = vmatpush1.bf16.xpose.msra.mxu0 0
        %839 = vmatprep.subr.bf16.mxu0 0
        %840 = vmatpush1.bf16.xpose.msra.mxu0 0
        %841 = vmatprep.subr.bf16.mxu0 0
        %842 = vmatpush1.bf16.xpose.msra.mxu0 0
        %843 = vmatprep.subr.bf16.mxu0 0
        %844 = vmatpush1.bf16.xpose.msra.mxu0 0
        %845 = vmatprep.subr.bf16.mxu0 0
        %846 = vmatpush1.bf16.xpose.msra.mxu0 0
        %847 = vmatprep.subr.bf16.mxu0 0
        %848 = vmatpush1.bf16.xpose.msra.mxu0 0
        %849 = vmatprep.subr.bf16.mxu0 0
        %850 = vmatpush1.bf16.xpose.msra.mxu0 %v833
        %851 = vmatprep.subr.bf16.mxu0 0
        %852 = vmatpush2.bf16.xpose.msra.mxu0 0
        %853 = vmatprep.subr.bf16.mxu0 0
        %854 = vmatpush2.bf16.xpose.msra.mxu0 0
        %855 = vmatprep.subr.bf16.mxu0 0
        %856 = vmatpush2.bf16.xpose.msra.mxu0 0
        %857 = vmatprep.subr.bf16.mxu0 0
        %858 = vmatpush2.bf16.xpose.msra.mxu0 0
        %859 = vmatprep.subr.bf16.mxu0 0
        %860 = vmatpush2.bf16.xpose.msra.mxu0 0
        %861 = vmatprep.subr.bf16.mxu0 0
        %862 = vmatpush2.bf16.xpose.msra.mxu0 0
        %863 = vmatprep.subr.bf16.mxu0 0
        %864 = vmatpush2.bf16.xpose.msra.mxu0 0
        %865 = vmatprep.subr.bf16.mxu0 0
        %866 = vmatpush2.bf16.xpose.msra.mxu0 0
        %867 = vmatprep.mubr.bf16.mxu0 0
        %868 = vmatmul.mubr.bf16.gmra.mxu0 %v830
        %v869 = vpop.f32.mrf.mxu0
        %v870 = vadd.f32 0.0, %v869
        %v871 = vpop.f32.mrf.mxu0
        %v872 = vpop.f32.mrf.mxu0
        %v873 = vpop.f32.mrf.mxu0
        %874 = vdwg.mxu0
        %v876 = vsel %vm427, %v729, 0
        %v879 = vsel %vm427, %v660, 0
        %881 = vmatprep.subr.bf16.mxu0 0
        %882 = vmatpush1.bf16.xpose.msra.mxu0 0
        %883 = vmatprep.subr.bf16.mxu0 0
        %884 = vmatpush1.bf16.xpose.msra.mxu0 0
        %885 = vmatprep.subr.bf16.mxu0 0
        %886 = vmatpush1.bf16.xpose.msra.mxu0 0
        %887 = vmatprep.subr.bf16.mxu0 0
        %888 = vmatpush1.bf16.xpose.msra.mxu0 0
        %889 = vmatprep.subr.bf16.mxu0 0
        %890 = vmatpush1.bf16.xpose.msra.mxu0 0
        %891 = vmatprep.subr.bf16.mxu0 0
        %892 = vmatpush1.bf16.xpose.msra.mxu0 0
        %893 = vmatprep.subr.bf16.mxu0 0
        %894 = vmatpush1.bf16.xpose.msra.mxu0 0
        %895 = vmatprep.subr.bf16.mxu0 0
        %896 = vmatpush1.bf16.xpose.msra.mxu0 %v879
        %897 = vmatprep.subr.bf16.mxu0 0
        %898 = vmatpush2.bf16.xpose.msra.mxu0 0
        %899 = vmatprep.subr.bf16.mxu0 0
        %900 = vmatpush2.bf16.xpose.msra.mxu0 0
        %901 = vmatprep.subr.bf16.mxu0 0
        %902 = vmatpush2.bf16.xpose.msra.mxu0 0
        %903 = vmatprep.subr.bf16.mxu0 0
        %904 = vmatpush2.bf16.xpose.msra.mxu0 0
        %905 = vmatprep.subr.bf16.mxu0 0
        %906 = vmatpush2.bf16.xpose.msra.mxu0 0
        %907 = vmatprep.subr.bf16.mxu0 0
        %908 = vmatpush2.bf16.xpose.msra.mxu0 0
        %909 = vmatprep.subr.bf16.mxu0 0
        %910 = vmatpush2.bf16.xpose.msra.mxu0 0
        %911 = vmatprep.subr.bf16.mxu0 0
        %912 = vmatpush2.bf16.xpose.msra.mxu0 0
        %913 = vmatprep.mubr.bf16.mxu0 0
        %914 = vmatmul.mubr.bf16.gmra.mxu0 %v876
        %v915 = vpop.f32.mrf.mxu0
        %v916 = vadd.f32 0.0, %v915
        %v917 = vpop.f32.mrf.mxu0
        %v918 = vpop.f32.mrf.mxu0
        %v919 = vpop.f32.mrf.mxu0
        %920 = vdwg.mxu0
        %921 = vxpose.xlu0.b32.start [1/16] %v778, 128
        %922 = vxpose.xlu0.b32.cont [2/16] 0.0, 128
        %923 = vxpose.xlu0.b32.cont [3/16] 0.0, 128
        %924 = vxpose.xlu0.b32.cont [4/16] 0.0, 128
        %925 = vxpose.xlu0.b32.cont [5/16] 0.0, 128
        %926 = vxpose.xlu0.b32.cont [6/16] 0.0, 128
        %927 = vxpose.xlu0.b32.cont [7/16] 0.0, 128
        %928 = vxpose.xlu0.b32.cont [8/16] 0.0, 128
        %929 = vxpose.xlu0.b32.cont [9/16] 0.0, 128
        %930 = vxpose.xlu0.b32.cont [10/16] 0.0, 128
        %931 = vxpose.xlu0.b32.cont [11/16] 0.0, 128
        %932 = vxpose.xlu0.b32.cont [12/16] 0.0, 128
        %933 = vxpose.xlu0.b32.cont [13/16] 0.0, 128
        %934 = vxpose.xlu0.b32.cont [14/16] 0.0, 128
        %935 = vxpose.xlu0.b32.cont [15/16] 0.0, 128
        %936 = vxpose.xlu0.b32.end [16/16] 0.0, 128
        %v937 = vpop.trf.xlu0
        %v938 = vpop.trf.xlu0
        %v939 = vpop.trf.xlu0
        %v940 = vpop.trf.xlu0
        %v941 = vpop.trf.xlu0
        %v942 = vpop.trf.xlu0
        %v943 = vpop.trf.xlu0
        %v944 = vpop.trf.xlu0
        %v945 = vpop.trf.xlu0
        %v946 = vpop.trf.xlu0
        %v947 = vpop.trf.xlu0
        %v948 = vpop.trf.xlu0
        %v949 = vpop.trf.xlu0
        %v950 = vpop.trf.xlu0
        %v951 = vpop.trf.xlu0
        %v952 = vpop.trf.xlu0
        %953 = vxpose.xlu0.b32.start [1/16] %v824, 128
        %954 = vxpose.xlu0.b32.cont [2/16] 0.0, 128
        %955 = vxpose.xlu0.b32.cont [3/16] 0.0, 128
        %956 = vxpose.xlu0.b32.cont [4/16] 0.0, 128
        %957 = vxpose.xlu0.b32.cont [5/16] 0.0, 128
        %958 = vxpose.xlu0.b32.cont [6/16] 0.0, 128
        %959 = vxpose.xlu0.b32.cont [7/16] 0.0, 128
        %960 = vxpose.xlu0.b32.cont [8/16] 0.0, 128
        %961 = vxpose.xlu0.b32.cont [9/16] 0.0, 128
        %962 = vxpose.xlu0.b32.cont [10/16] 0.0, 128
        %963 = vxpose.xlu0.b32.cont [11/16] 0.0, 128
        %964 = vxpose.xlu0.b32.cont [12/16] 0.0, 128
        %965 = vxpose.xlu0.b32.cont [13/16] 0.0, 128
        %966 = vxpose.xlu0.b32.cont [14/16] 0.0, 128
        %967 = vxpose.xlu0.b32.cont [15/16] 0.0, 128
        %968 = vxpose.xlu0.b32.end [16/16] 0.0, 128
        %v969 = vpop.trf.xlu0
        %v970 = vpop.trf.xlu0
        %v971 = vpop.trf.xlu0
        %v972 = vpop.trf.xlu0
        %v973 = vpop.trf.xlu0
        %v974 = vpop.trf.xlu0
        %v975 = vpop.trf.xlu0
        %v976 = vpop.trf.xlu0
        %v977 = vpop.trf.xlu0
        %v978 = vpop.trf.xlu0
        %v979 = vpop.trf.xlu0
        %v980 = vpop.trf.xlu0
        %v981 = vpop.trf.xlu0
        %v982 = vpop.trf.xlu0
        %v983 = vpop.trf.xlu0
        %v984 = vpop.trf.xlu0
        %985 = vxpose.xlu0.b32.start [1/16] %v870, 128
        %986 = vxpose.xlu0.b32.cont [2/16] 0.0, 128
        %987 = vxpose.xlu0.b32.cont [3/16] 0.0, 128
        %988 = vxpose.xlu0.b32.cont [4/16] 0.0, 128
        %989 = vxpose.xlu0.b32.cont [5/16] 0.0, 128
        %990 = vxpose.xlu0.b32.cont [6/16] 0.0, 128
        %991 = vxpose.xlu0.b32.cont [7/16] 0.0, 128
        %992 = vxpose.xlu0.b32.cont [8/16] 0.0, 128
        %993 = vxpose.xlu0.b32.cont [9/16] 0.0, 128
        %994 = vxpose.xlu0.b32.cont [10/16] 0.0, 128
        %995 = vxpose.xlu0.b32.cont [11/16] 0.0, 128
        %996 = vxpose.xlu0.b32.cont [12/16] 0.0, 128
        %997 = vxpose.xlu0.b32.cont [13/16] 0.0, 128
        %998 = vxpose.xlu0.b32.cont [14/16] 0.0, 128
        %999 = vxpose.xlu0.b32.cont [15/16] 0.0, 128
        %1000 = vxpose.xlu0.b32.end [16/16] 0.0, 128
        %v1001 = vpop.trf.xlu0
        %v1002 = vpop.trf.xlu0
        %v1003 = vpop.trf.xlu0
        %v1004 = vpop.trf.xlu0
        %v1005 = vpop.trf.xlu0
        %v1006 = vpop.trf.xlu0
        %v1007 = vpop.trf.xlu0
        %v1008 = vpop.trf.xlu0
        %v1009 = vpop.trf.xlu0
        %v1010 = vpop.trf.xlu0
        %v1011 = vpop.trf.xlu0
        %v1012 = vpop.trf.xlu0
        %v1013 = vpop.trf.xlu0
        %v1014 = vpop.trf.xlu0
        %v1015 = vpop.trf.xlu0
        %v1016 = vpop.trf.xlu0
        %1017 = vxpose.xlu0.b32.start [1/16] %v916, 128
        %1018 = vxpose.xlu0.b32.cont [2/16] 0.0, 128
        %1019 = vxpose.xlu0.b32.cont [3/16] 0.0, 128
        %1020 = vxpose.xlu0.b32.cont [4/16] 0.0, 128
        %1021 = vxpose.xlu0.b32.cont [5/16] 0.0, 128
        %1022 = vxpose.xlu0.b32.cont [6/16] 0.0, 128
        %1023 = vxpose.xlu0.b32.cont [7/16] 0.0, 128
        %1024 = vxpose.xlu0.b32.cont [8/16] 0.0, 128
        %1025 = vxpose.xlu0.b32.cont [9/16] 0.0, 128
        %1026 = vxpose.xlu0.b32.cont [10/16] 0.0, 128
        %1027 = vxpose.xlu0.b32.cont [11/16] 0.0, 128
        %1028 = vxpose.xlu0.b32.cont [12/16] 0.0, 128
        %1029 = vxpose.xlu0.b32.cont [13/16] 0.0, 128
        %1030 = vxpose.xlu0.b32.cont [14/16] 0.0, 128
        %1031 = vxpose.xlu0.b32.cont [15/16] 0.0, 128
        %1032 = vxpose.xlu0.b32.end [16/16] 0.0, 128
        %v1033 = vpop.trf.xlu0
        %v1034 = vpop.trf.xlu0
        %v1035 = vpop.trf.xlu0
        %v1036 = vpop.trf.xlu0
        %v1037 = vpop.trf.xlu0
        %v1038 = vpop.trf.xlu0
        %v1039 = vpop.trf.xlu0
        %v1040 = vpop.trf.xlu0
        %v1041 = vpop.trf.xlu0
        %v1042 = vpop.trf.xlu0
        %v1043 = vpop.trf.xlu0
        %v1044 = vpop.trf.xlu0
        %v1045 = vpop.trf.xlu0
        %v1046 = vpop.trf.xlu0
        %v1047 = vpop.trf.xlu0
        %v1048 = vpop.trf.xlu0
        %v1049 = vcombine.low %v937, %v1001
        %v1050 = vcombine.high %v937, %v1001
        %v1052 = vunpack.c.l.s4 1983009808
        %v1053 = vunpack.c.0.s8 %v1052
        %v1054 = vlaneseq
        %v1055 = vshrl.u32 %v1054, 7
        %v1056 = vsub.s32 %v1053, %v1055
        %v1057 = vrot.slane %v1049, %v1056
        %v1059 = vunpack.c.l.s4 1983009808
        %v1060 = vunpack.c.0.s8 %v1059
        %v1061 = vlaneseq
        %v1062 = vshrl.u32 %v1061, 7
        %v1063 = vsub.s32 %v1060, %v1062
        %v1064 = vrot.slane %v1050, %v1063
        %v1065 = vcombine.low %v969, %v1033
        %v1066 = vcombine.high %v969, %v1033
        %v1068 = vunpack.c.l.s4 1983009808
        %v1069 = vunpack.c.0.s8 %v1068
        %v1070 = vlaneseq
        %v1071 = vshrl.u32 %v1070, 7
        %v1072 = vsub.s32 %v1069, %v1071
        %v1073 = vrot.slane %v1065, %v1072
        %v1075 = vunpack.c.l.s4 1983009808
        %v1076 = vunpack.c.0.s8 %v1075
        %v1077 = vlaneseq
        %v1078 = vshrl.u32 %v1077, 7
        %v1079 = vsub.s32 %v1076, %v1078
        %v1080 = vrot.slane %v1066, %v1079
        %v1081 = vcombine.low %v1057, %v1073
        %v1082 = vcombine.high %v1057, %v1073
        %v1084 = vunpack.c.l.s4 1934713408
        %v1085 = vunpack.c.0.s8 %v1084
        %v1086 = vlaneseq
        %v1087 = vshrl.u32 %v1086, 7
        %v1088 = vsub.s32 %v1085, %v1087
        %v1089 = vrot.slane %v1081, %v1088
        %v1091 = vunpack.c.l.s4 1934713408
        %v1092 = vunpack.c.0.s8 %v1091
        %v1093 = vlaneseq
        %v1094 = vshrl.u32 %v1093, 7
        %v1095 = vsub.s32 %v1092, %v1094
        %v1096 = vrot.slane %v1082, %v1095
        %v1097 = vcombine.low %v1064, %v1080
        %v1098 = vcombine.high %v1064, %v1080
        %v1100 = vunpack.c.l.s4 1934713408
        %v1101 = vunpack.c.0.s8 %v1100
        %v1102 = vlaneseq
        %v1103 = vshrl.u32 %v1102, 7
        %v1104 = vsub.s32 %v1101, %v1103
        %v1105 = vrot.slane %v1097, %v1104
        %v1107 = vunpack.c.l.s4 1934713408
        %v1108 = vunpack.c.0.s8 %v1107
        %v1109 = vlaneseq
        %v1110 = vshrl.u32 %v1109, 7
        %v1111 = vsub.s32 %v1108, %v1110
        %v1112 = vrot.slane %v1098, %v1111
        %v1113 = vcombine.high %v1089, 0.0
        %v1114 = vcombine.high %v1096, 0.0
        %v1115 = vcombine.high %v1105, 0.0
        %v1116 = vcombine.high %v1112, 0.0
        %v1117 = vcombine.low %v1089, %v1096
        %v1119 = vunpack.c.l.s4 1983009808
        %v1120 = vunpack.c.0.s8 %v1119
        %v1121 = vlaneseq
        %v1122 = vshrl.u32 %v1121, 7
        %v1123 = vsub.s32 %v1120, %v1122
        %v1124 = vrot.slane %v1117, %v1123
        %v1125 = vcombine.low %v1113, %v1114
        %v1127 = vunpack.c.l.s4 1983009808
        %v1128 = vunpack.c.0.s8 %v1127
        %v1129 = vlaneseq
        %v1130 = vshrl.u32 %v1129, 7
        %v1131 = vsub.s32 %v1128, %v1130
        %v1132 = vrot.slane %v1125, %v1131
        %v1133 = vcombine.low %v1105, %v1112
        %v1135 = vunpack.c.l.s4 1983009808
        %v1136 = vunpack.c.0.s8 %v1135
        %v1137 = vlaneseq
        %v1138 = vshrl.u32 %v1137, 7
        %v1139 = vsub.s32 %v1136, %v1138
        %v1140 = vrot.slane %v1133, %v1139
        %v1141 = vcombine.low %v1115, %v1116
        %v1143 = vunpack.c.l.s4 1983009808
        %v1144 = vunpack.c.0.s8 %v1143
        %v1145 = vlaneseq
        %v1146 = vshrl.u32 %v1145, 7
        %v1147 = vsub.s32 %v1144, %v1146
        %v1148 = vrot.slane %v1141, %v1147
        %v1149 = vcombine.low %v1124, %v1132
        %v1150 = vcombine.high %v1124, %v1132
        %v1152 = vunpack.c.l.s4 1934713408
        %v1153 = vunpack.c.0.s8 %v1152
        %v1154 = vlaneseq
        %v1155 = vshrl.u32 %v1154, 7
        %v1156 = vsub.s32 %v1153, %v1155
        %v1157 = vrot.slane %v1149, %v1156
        %v1159 = vunpack.c.l.s4 1934713408
        %v1160 = vunpack.c.0.s8 %v1159
        %v1161 = vlaneseq
        %v1162 = vshrl.u32 %v1161, 7
        %v1163 = vsub.s32 %v1160, %v1162
        %v1164 = vrot.slane %v1150, %v1163
        %v1165 = vcombine.low %v1140, %v1148
        %v1166 = vcombine.high %v1140, %v1148
        %v1168 = vunpack.c.l.s4 1934713408
        %v1169 = vunpack.c.0.s8 %v1168
        %v1170 = vlaneseq
        %v1171 = vshrl.u32 %v1170, 7
        %v1172 = vsub.s32 %v1169, %v1171
        %v1173 = vrot.slane %v1165, %v1172
        %v1175 = vunpack.c.l.s4 1934713408
        %v1176 = vunpack.c.0.s8 %v1175
        %v1177 = vlaneseq
        %v1178 = vshrl.u32 %v1177, 7
        %v1179 = vsub.s32 %v1176, %v1178
        %v1180 = vrot.slane %v1166, %v1179
        %v1181 = vcombine.low %v1157, %v1173
        %v1182 = vcombine.high %v1157, %v1173
        %v1183 = vcombine.low %v1164, %v1180
        %v1184 = vcombine.high %v1164, %v1180
        %1186 = vrot.lane.b32.xlu0 %v1182, 8
        %v1187 = vpop.permute.xlu0 %1186
        %1190 = vrot.lane.b32.xlu0 %v1183, 16
        %v1191 = vpop.permute.xlu0 %1190
        %1194 = vrot.lane.b32.xlu0 %v1184, 24
        %v1195 = vpop.permute.xlu0 %1194
        %v1197 = vsel %vm427, %v1181, %v1187
        %vm1198 = vcmask 130048
        %v1199 = vsel %vm1198, %v1197, %v1191
        %vm1200 = vcmask 195584
        %v1201 = vsel %vm1200, %v1199, %v1195
        %v1202 = vpack.c.bf16 %v1201, %v1201
        %v1203 = vld [vmem:[%s2] sm:$0xf]
        %v1204 = vld [vmem:[%s2 + $0x4] sm:$0xf]
        %v1205 = vld [vmem:[%s2 + $0x8] sm:$0xf]
        %v1206 = vld [vmem:[%s2 + $0xc] sm:$0xf]
        %v1207 = vlaneseq
        %v1208 = vshrl.u32 %v1207, 7
        %v1209 = vsub.s32 1, %v1208
        %v1210 = vrot.slane %v276, %v1209
        %v1215 = vunpack.c.l.b16 %v1203
        %v1216 = vunpack.c.l.b16 %v1204
        %v1217 = vunpack.c.l.b16 %v1205
        %v1218 = vunpack.c.l.b16 %v1206
        %v1219 = vpack.c.b16 %v1216, %v1215
        %v1220 = vpack.c.b16 %v1218, %v1217
        %v1224 = vsel %vm299, %v1202, 0
        %1226 = vmatprep.subr.bf16.mxu0 0
        %1227 = vmatpush1.bf16.msra.mxu0 0
        %1228 = vmatprep.subr.bf16.mxu0 0
        %1229 = vmatpush1.bf16.msra.mxu0 0
        %1230 = vmatprep.subr.bf16.mxu0 0
        %1231 = vmatpush1.bf16.msra.mxu0 0
        %1232 = vmatprep.subr.bf16.mxu0 0
        %1233 = vmatpush1.bf16.msra.mxu0 0
        %1234 = vmatprep.subr.bf16.mxu0 0
        %1235 = vmatpush1.bf16.msra.mxu0 0
        %1236 = vmatprep.subr.bf16.mxu0 0
        %1237 = vmatpush1.bf16.msra.mxu0 0
        %1238 = vmatprep.subr.bf16.mxu0 0
        %1239 = vmatpush1.bf16.msra.mxu0 %v1220
        %1240 = vmatprep.subr.bf16.mxu0 0
        %1241 = vmatpush1.bf16.msra.mxu0 %v1219
        %1242 = vmatprep.subr.bf16.mxu0 0
        %1243 = vmatpush2.bf16.msra.mxu0 0
        %1244 = vmatprep.subr.bf16.mxu0 0
        %1245 = vmatpush2.bf16.msra.mxu0 0
        %1246 = vmatprep.subr.bf16.mxu0 0
        %1247 = vmatpush2.bf16.msra.mxu0 0
        %1248 = vmatprep.subr.bf16.mxu0 0
        %1249 = vmatpush2.bf16.msra.mxu0 0
        %1250 = vmatprep.subr.bf16.mxu0 0
        %1251 = vmatpush2.bf16.msra.mxu0 0
        %1252 = vmatprep.subr.bf16.mxu0 0
        %1253 = vmatpush2.bf16.msra.mxu0 0
        %1254 = vmatprep.subr.bf16.mxu0 0
        %1255 = vmatpush2.bf16.msra.mxu0 0
        %1256 = vmatprep.subr.bf16.mxu0 0
        %1257 = vmatpush2.bf16.msra.mxu0 0
        %1258 = vmatprep.mubr.bf16.mxu0 0
        %1259 = vmatmul.mubr.bf16.gmra.mxu0 %v1224
        %v1260 = vpop.f32.mrf.mxu0
        %v1261 = vadd.f32 %v1210, %v1260
        %v1262 = vpop.f32.mrf.mxu0
        %v1263 = vpop.f32.mrf.mxu0
        %v1264 = vpop.f32.mrf.mxu0
        %1265 = vdwg.mxu0
        %v1266 = vadd.f32 %v1261, %v277
        %v1267 = vsel %vm299, %v1266, 0.0
        %1268 = vadd.xlane.f32.xlu0 %v1267
        %v1269 = vpop.xlane.xlu0 %1268
        %v1270 = vrcp.pop 32.0
        %v1271 = vmul.f32 %v1269, %v1270
        %v1272 = vsub.f32 %v1266, %v1271
        %v1273 = vmul.f32 %v1272, %v1272
        %v1274 = vsel %vm299, %v1273, 0.0
        %1275 = vadd.xlane.f32.xlu0 %v1274
        %v1276 = vpop.xlane.xlu0 %1275
        %v1277 = vmul.f32 %v1276, %v1270
        %v1278 = vadd.f32 %v1277, 1e-05
        %v1279 = vrsqrt.pop %v1278
        %v1280 = vmul.f32 %v1272, %v1279
        %v1281 = vlaneseq
        %v1282 = vshrl.u32 %v1281, 7
        %v1283 = vsub.s32 2, %v1282
        %v1284 = vrot.slane %v276, %v1283
        %v1285 = vmul.f32 %v1280, %v1284
        %v1286 = vlaneseq
        %v1287 = vshrl.u32 %v1286, 7
        %v1288 = vsub.s32 3, %v1287
        %v1289 = vrot.slane %v276, %v1288
        %v1290 = vadd.f32 %v1285, %v1289
        %v1291 = vpack.c.bf16 %v1290, %v1290
        %v1292 = vld [vmem:[#allocation2] sm:$0xf]
        %v1293 = vld [vmem:[#allocation2 + $0x4] sm:$0xf]
        %v1294 = vld [vmem:[#allocation2 + $0x8] sm:$0xf]
        %v1295 = vld [vmem:[#allocation2 + $0xc] sm:$0xf]
        %v1296 = vlaneseq
        %v1297 = vshrl.u32 %v1296, 7
        %v1298 = vsub.s32 7, %v1297
        %v1299 = vrot.slane %v276, %v1298
        %v1304 = vunpack.c.l.b16 %v1292
        %v1305 = vunpack.c.l.b16 %v1293
        %v1306 = vunpack.c.l.b16 %v1294
        %v1307 = vunpack.c.l.b16 %v1295
        %v1308 = vpack.c.b16 %v1305, %v1304
        %v1309 = vpack.c.b16 %v1307, %v1306
        %v1313 = vsel %vm299, %v1291, 0
        %1315 = vmatprep.subr.bf16.mxu0 0
        %1316 = vmatpush1.bf16.msra.mxu0 0
        %1317 = vmatprep.subr.bf16.mxu0 0
        %1318 = vmatpush1.bf16.msra.mxu0 0
        %1319 = vmatprep.subr.bf16.mxu0 0
        %1320 = vmatpush1.bf16.msra.mxu0 0
        %1321 = vmatprep.subr.bf16.mxu0 0
        %1322 = vmatpush1.bf16.msra.mxu0 0
        %1323 = vmatprep.subr.bf16.mxu0 0
        %1324 = vmatpush1.bf16.msra.mxu0 0
        %1325 = vmatprep.subr.bf16.mxu0 0
        %1326 = vmatpush1.bf16.msra.mxu0 0
        %1327 = vmatprep.subr.bf16.mxu0 0
        %1328 = vmatpush1.bf16.msra.mxu0 %v1309
        %1329 = vmatprep.subr.bf16.mxu0 0
        %1330 = vmatpush1.bf16.msra.mxu0 %v1308
        %1331 = vmatprep.subr.bf16.mxu0 0
        %1332 = vmatpush2.bf16.msra.mxu0 0
        %1333 = vmatprep.subr.bf16.mxu0 0
        %1334 = vmatpush2.bf16.msra.mxu0 0
        %1335 = vmatprep.subr.bf16.mxu0 0
        %1336 = vmatpush2.bf16.msra.mxu0 0
        %1337 = vmatprep.subr.bf16.mxu0 0
        %1338 = vmatpush2.bf16.msra.mxu0 0
        %1339 = vmatprep.subr.bf16.mxu0 0
        %1340 = vmatpush2.bf16.msra.mxu0 0
        %1341 = vmatprep.subr.bf16.mxu0 0
        %1342 = vmatpush2.bf16.msra.mxu0 0
        %1343 = vmatprep.subr.bf16.mxu0 0
        %1344 = vmatpush2.bf16.msra.mxu0 0
        %1345 = vmatprep.subr.bf16.mxu0 0
        %1346 = vmatpush2.bf16.msra.mxu0 0
        %1347 = vmatprep.mubr.bf16.mxu0 0
        %1348 = vmatmul.mubr.bf16.gmra.mxu0 %v1313
        %v1349 = vpop.f32.mrf.mxu0
        %v1350 = vadd.f32 %v1299, %v1349
        %v1351 = vpop.f32.mrf.mxu0
        %v1352 = vpop.f32.mrf.mxu0
        %v1353 = vpop.f32.mrf.mxu0
        %1354 = vdwg.mxu0
        %v1355 = vmul.f32 %v1350, 0.5
        %v1356 = vrcp.pop 1.4142135
        %v1357 = vmul.f32 %v1350, %v1356
        %v1358 = verf.f32.pop %v1357
        %v1359 = vadd.f32 %v1358, 1.0
        %v1360 = vmul.f32 %v1355, %v1359
        %v1361 = vpack.c.bf16 %v1360, %v1360
        %v1362 = vld [vmem:[%s4] sm:$0xf]
        %v1363 = vld [vmem:[%s4 + $0x4] sm:$0xf]
        %v1364 = vld [vmem:[%s4 + $0x8] sm:$0xf]
        %v1365 = vld [vmem:[%s4 + $0xc] sm:$0xf]
        %v1366 = vld [vmem:[%s4 + $0x10] sm:$0xf]
        %v1367 = vld [vmem:[%s4 + $0x14] sm:$0xf]
        %v1368 = vld [vmem:[%s4 + $0x18] sm:$0xf]
        %v1369 = vld [vmem:[%s4 + $0x1c] sm:$0xf]
        %v1370 = vlaneseq
        %v1371 = vshrl.u32 %v1370, 7
        %v1372 = vsub.s32 4, %v1371
        %v1373 = vrot.slane %v276, %v1372
        %v1382 = vunpack.c.l.b16 %v1362
        %v1383 = vunpack.c.l.b16 %v1363
        %v1384 = vunpack.c.l.b16 %v1364
        %v1385 = vunpack.c.l.b16 %v1365
        %v1386 = vunpack.c.l.b16 %v1366
        %v1387 = vunpack.c.l.b16 %v1367
        %v1388 = vunpack.c.l.b16 %v1368
        %v1389 = vunpack.c.l.b16 %v1369
        %v1390 = vpack.c.b16 %v1383, %v1382
        %v1391 = vpack.c.b16 %v1385, %v1384
        %v1392 = vpack.c.b16 %v1387, %v1386
        %v1393 = vpack.c.b16 %v1389, %v1388
        %vm1398 = vcmask 523264
        %v1400 = vsel %vm1398, %v1361, 0
        %1402 = vmatprep.subr.bf16.mxu0 0
        %1403 = vmatpush1.bf16.msra.mxu0 0
        %1404 = vmatprep.subr.bf16.mxu0 0
        %1405 = vmatpush1.bf16.msra.mxu0 0
        %1406 = vmatprep.subr.bf16.mxu0 0
        %1407 = vmatpush1.bf16.msra.mxu0 0
        %1408 = vmatprep.subr.bf16.mxu0 0
        %1409 = vmatpush1.bf16.msra.mxu0 0
        %1410 = vmatprep.subr.bf16.mxu0 0
        %1411 = vmatpush1.bf16.msra.mxu0 %v1393
        %1412 = vmatprep.subr.bf16.mxu0 0
        %1413 = vmatpush1.bf16.msra.mxu0 %v1392
        %1414 = vmatprep.subr.bf16.mxu0 0
        %1415 = vmatpush1.bf16.msra.mxu0 %v1391
        %1416 = vmatprep.subr.bf16.mxu0 0
        %1417 = vmatpush1.bf16.msra.mxu0 %v1390
        %1418 = vmatprep.subr.bf16.mxu0 0
        %1419 = vmatpush2.bf16.msra.mxu0 0
        %1420 = vmatprep.subr.bf16.mxu0 0
        %1421 = vmatpush2.bf16.msra.mxu0 0
        %1422 = vmatprep.subr.bf16.mxu0 0
        %1423 = vmatpush2.bf16.msra.mxu0 0
        %1424 = vmatprep.subr.bf16.mxu0 0
        %1425 = vmatpush2.bf16.msra.mxu0 0
        %1426 = vmatprep.subr.bf16.mxu0 0
        %1427 = vmatpush2.bf16.msra.mxu0 0
        %1428 = vmatprep.subr.bf16.mxu0 0
        %1429 = vmatpush2.bf16.msra.mxu0 0
        %1430 = vmatprep.subr.bf16.mxu0 0
        %1431 = vmatpush2.bf16.msra.mxu0 0
        %1432 = vmatprep.subr.bf16.mxu0 0
        %1433 = vmatpush2.bf16.msra.mxu0 0
        %1434 = vmatprep.mubr.bf16.mxu0 0
        %1435 = vmatmul.mubr.bf16.gmra.mxu0 %v1400
        %v1436 = vpop.f32.mrf.mxu0
        %v1437 = vadd.f32 %v1373, %v1436
        %v1438 = vpop.f32.mrf.mxu0
        %v1439 = vpop.f32.mrf.mxu0
        %v1440 = vpop.f32.mrf.mxu0
        %1441 = vdwg.mxu0
        %v1442 = vadd.f32 %v1437, %v1290
        %v1443 = vsel %vm299, %v1442, 0.0
        %1444 = vadd.xlane.f32.xlu0 %v1443
        %v1445 = vpop.xlane.xlu0 %1444
        %v1446 = vmul.f32 %v1445, %v1270
        %v1447 = vsub.f32 %v1442, %v1446
        %v1448 = vmul.f32 %v1447, %v1447
        %v1449 = vsel %vm299, %v1448, 0.0
        %1450 = vadd.xlane.f32.xlu0 %v1449
        %v1451 = vpop.xlane.xlu0 %1450
        %v1452 = vmul.f32 %v1451, %v1270
        %v1453 = vadd.f32 %v1452, 1e-05
        %v1454 = vrsqrt.pop %v1453
        %v1455 = vmul.f32 %v1447, %v1454
        %v1456 = vlaneseq
        %v1457 = vshrl.u32 %v1456, 7
        %v1458 = vsub.s32 5, %v1457
        %v1459 = vrot.slane %v276, %v1458
        %v1460 = vmul.f32 %v1455, %v1459
        %v1461 = vlaneseq
        %v1462 = vshrl.u32 %v1461, 7
        %v1463 = vsub.s32 6, %v1462
        %v1464 = vrot.slane %v276, %v1463
        %v1465 = vadd.f32 %v1460, %v1464
        %1466 = vst.msk [vmem:[%s270] sm:$0xff] %vm299, %v1465
        %s1467 = sand.u32 %s161, 1
        %s1468 = scalar_lea.sflag [#allocation4], %s1467
        %s1469 = sand.u32 %s161, 1
        %s1470 = smul.addr %s1469, 8
        %s1471 = scalar_lea.vmem [#allocation7], %s1470
        // Predicated region
        $region53: #{xlm_roberta_layer.1} parent=43 // pred_check
          %p1472 = pneg %p171
        $region54: #{xlm_roberta_layer.1} parent=43 // pred_check_branch
          %1474 = sbr.rel (%p1472) target = $region56
        $region55: #{xlm_roberta_layer.1} parent=43 // pred_region
          %s1476 = ssub.s32 128, 128
          %1477 = vsyncadd %s1468, %s1476
          %s1478 = smul.addr %s22, 128
          %s1479 = scalar_lea.hbm %s6, %s1478
          %s1481 = sshll.u32 %s1471, 4
          %s1482 = int_to_ptr.vmem [resolvable:$true] %s1481
          %1484 = dma.vmem_to_hbm [thread:$0]  %s1482, 128, %s1479, %s1468
        $region56: #{xlm_roberta_layer.1} parent=43 // pred_fallthru
          _
      $region44: #{xlm_roberta_layer.1} parent=5 // pred_fallthru
        _
      %p1485 = scmp.le.s32.totalorder 2, %s17
      // Predicated region
      $region57: #{xlm_roberta_layer.1} parent=5 // pred_check
        %p1486 = pneg %p1485
      $region58: #{xlm_roberta_layer.1} parent=5 // pred_check_branch
        %1488 = sbr.rel (%p1486) target = $region60
      $region59: #{xlm_roberta_layer.1} parent=5 // pred_region
        %s1489 = ssub.s32 %s17, 2
        // Predicated region
        $region61: #{xlm_roberta_layer.1} parent=59 // pred_check
          %p1490 = pneg %p177
        $region62: #{xlm_roberta_layer.1} parent=59 // pred_check_branch
          %1492 = sbr.rel (%p1490) target = $region64
        $region63: #{xlm_roberta_layer.1} parent=59 // pred_region
          %s1493 = sand.u32 %s162, 1
          %s1494 = scalar_lea.sflag [#allocation4], %s1493
          %s1495 = sand.u32 %s162, 1
          %s1496 = smul.addr %s1495, 8
          %s1497 = scalar_lea.vmem [#allocation7], %s1496
          %1498 = dma.done %s1494, 128
        $region64: #{xlm_roberta_layer.1} parent=59 // pred_fallthru
          _
      $region60: #{xlm_roberta_layer.1} parent=5 // pred_fallthru
        _
    $region6: #{xlm_roberta_layer.1} parent=1 // loop_footer
      %s21 = sadd.s32 1, %s17
    $region7: #{xlm_roberta_layer.1} parent=1 // loop_footer_branch
      %16 = sbr.rel target = $region3
    $region8: #{xlm_roberta_layer.1} parent=1 // loop_exit
      _
    %1499 = vsyncpa [#allocation3], 1
    %s1500 = scalar_lea.sflag [#allocation3], 1
    %1501 = vsyncpa %s1500, 1
    %1502 = vsyncpa [#allocation6], 1
    %1503 = vsyncpa [#allocation4], 1
    %s1504 = scalar_lea.sflag [#allocation4], 1
    %1505 = vsyncpa %s1504, 1

</llo_original>
